<compile_context>
chip_gen: v6e
topology: v6e:2x2x1
jax: 0.10.0
libtpu: 0.0.40
codegen_flags: <defaults>
</compile_context>

<pallas_src>
import functools

import jax
import jax.numpy as jnp
from jax.experimental import pallas as pl
from jax.experimental.pallas import tpu as pltpu

CURRENT_DIFFUSION_STEPS = 1000.0  # stand-in for the module's global


def _round_up(n, m):
    return ((n + m - 1) // m) * m


def _mlp_kernel(x_ref, t_ref, w1_ref, w1t_ref, b1_ref, w2_ref, b2_ref,
                w3_ref, b3_ref, w4_ref, b4_ref, o_ref):
    """One batch tile of the fused 4-layer MLP.

    x_ref : (TB, D_pad) bf16   zero-padded inputs
    t_ref : (TB, 1)     f32    t / current_diffusion_steps
    w*    : bf16 weights (in_pad, out_pad); w1t_ref/b*_ref are f32 (1, out_pad)
    o_ref : (TB, D_pad) f32    zero-padded outputs
    """
    # Layer 1: MXU matmul (bf16 -> f32 acc) + t-column folded in on the VPU.
    h = jnp.dot(x_ref[...], w1_ref[...], preferred_element_type=jnp.float32)
    h = h + t_ref[...] * w1t_ref[...] + b1_ref[...]
    h = jnp.maximum(h, 0.0).astype(jnp.bfloat16)

    h = jnp.dot(h, w2_ref[...], preferred_element_type=jnp.float32) + b2_ref[...]
    h = jnp.maximum(h, 0.0).astype(jnp.bfloat16)

    h = jnp.dot(h, w3_ref[...], preferred_element_type=jnp.float32) + b3_ref[...]
    h = jnp.maximum(h, 0.0).astype(jnp.bfloat16)

    y = jnp.dot(h, w4_ref[...], preferred_element_type=jnp.float32) + b4_ref[...]
    o_ref[...] = y.astype(o_ref.dtype)


def init_params(key, input_dim, hidden_dim):
    """PyTorch-Linear-style init: U(-1/sqrt(fan_in), 1/sqrt(fan_in)).

    Weights are stored (in_features, out_features) so y = x @ W + b; W1 keeps
    the original (input_dim + 1) rows (last row is the t column)."""
    dims = [(input_dim + 1, hidden_dim),
            (hidden_dim, hidden_dim),
            (hidden_dim, hidden_dim),
            (hidden_dim, input_dim)]
    params = []
    for fan_in, fan_out in dims:
        key, kw, kb = jax.random.split(key, 3)
        bound = 1.0 / (fan_in ** 0.5)
        W = jax.random.uniform(kw, (fan_in, fan_out), jnp.float32, -bound, bound)
        b = jax.random.uniform(kb, (1, fan_out), jnp.float32, -bound, bound)
        params.append((W, b))
    return params


def prepare_params(params, input_dim, compute_dtype=jnp.bfloat16):
    """Split W1 into (x-part, t-part), zero-pad features to 128 lanes, cast
    matmul weights to bf16 (biases / t-column stay fp32)."""
    (W1, b1), (W2, b2), (W3, b3), (W4, b4) = params
    D = input_dim
    H = W1.shape[1]
    D_pad = _round_up(max(D, 1), 128)
    H_pad = _round_up(H, 128)

    def pad2(a, rows, cols):
        return jnp.pad(a, ((0, rows - a.shape[0]), (0, cols - a.shape[1])))

    W1x = pad2(W1[:D, :], D_pad, H_pad).astype(compute_dtype)      # (D_pad, H_pad)
    w1t = pad2(W1[D:D + 1, :], 1, H_pad).astype(jnp.float32)       # (1, H_pad)
    b1p = pad2(b1, 1, H_pad).astype(jnp.float32)
    W2p = pad2(W2, H_pad, H_pad).astype(compute_dtype)
    b2p = pad2(b2, 1, H_pad).astype(jnp.float32)
    W3p = pad2(W3, H_pad, H_pad).astype(compute_dtype)
    b3p = pad2(b3, 1, H_pad).astype(jnp.float32)
    W4p = pad2(W4, H_pad, D_pad).astype(compute_dtype)
    b4p = pad2(b4, 1, D_pad).astype(jnp.float32)
    return (W1x, w1t, b1p, W2p, b2p, W3p, b3p, W4p, b4p)


def diffusion_mlp_v2(x, t, padded_params, *, batch_tile=256):
    """x: (B, D) float32, t: (B,) int/float. Returns (B, D) float32."""
    B, D = x.shape
    W1x, w1t, b1, W2, b2, W3, b3, W4, b4 = padded_params
    D_pad, H_pad = W1x.shape
    assert W4.shape == (H_pad, D_pad) and D_pad >= D

    t_norm = (t.astype(jnp.float32) / CURRENT_DIFFUSION_STEPS).reshape(B, 1)

    # Zero-pad the feature dim to the lane-aligned width; cast MXU input to bf16.
    x_pad = jnp.pad(x.astype(jnp.float32), ((0, 0), (0, D_pad - D)))
    x_pad = x_pad.astype(W1x.dtype)

    tb = min(batch_tile, B)
    grid = (pl.cdiv(B, tb),)

    # Constant index_map => weights stay resident in VMEM across batch tiles.
    rep = lambda a: pl.BlockSpec(a.shape, lambda i: (0, 0))

    out = pl.pallas_call(
        _mlp_kernel,
        out_shape=jax.ShapeDtypeStruct((B, D_pad), jnp.float32),
        grid_spec=pltpu.PrefetchScalarGridSpec(
            num_scalar_prefetch=0,
            grid=grid,
            in_specs=[
                pl.BlockSpec((tb, D_pad), lambda i: (i, 0)),   # x tile
                pl.BlockSpec((tb, 1), lambda i: (i, 0)),       # t_norm tile
                rep(W1x), rep(w1t), rep(b1),
                rep(W2), rep(b2),
                rep(W3), rep(b3),
                rep(W4), rep(b4),
            ],
            out_specs=pl.BlockSpec((tb, D_pad), lambda i: (i, 0)),
        ),
        compiler_params=pltpu.CompilerParams(
            dimension_semantics=("parallel",),
            vmem_limit_bytes=32 * 1024 * 1024,
        ),
    )(x_pad, t_norm, W1x, w1t, b1, W2, b2, W3, b3, W4, b4)

    return out[:, :D]


def _reference(x, t, params):
    """Pure fp32 JAX reference matching the PyTorch module."""
    t_norm = t.astype(jnp.float32)[:, None] / CURRENT_DIFFUSION_STEPS
    h = jnp.concatenate([x.astype(jnp.float32), t_norm], axis=1)
    (W1, b1), (W2, b2), (W3, b3), (W4, b4) = params
    h = jnp.maximum(h @ W1 + b1, 0.0)
    h = jnp.maximum(h @ W2 + b2, 0.0)
    h = jnp.maximum(h @ W3 + b3, 0.0)
    return h @ W4 + b4


if __name__ == "__main__":
    # Small demo config (module default hidden_dim is 1024; 256 keeps the demo
    # small while staying 128-lane aligned). Two batch tiles -> parallel grid.
    B, INPUT_DIM, HIDDEN_DIM = 256, 16, 256

    key = jax.random.PRNGKey(0)
    kx, kt, kp = jax.random.split(key, 3)

    x = jax.random.normal(kx, (B, INPUT_DIM), jnp.float32)
    t = jax.random.randint(kt, (B,), 0, int(CURRENT_DIFFUSION_STEPS), jnp.int32)

    params = init_params(kp, INPUT_DIM, HIDDEN_DIM)
    padded_params = prepare_params(params, INPUT_DIM)

    fwd = jax.jit(functools.partial(diffusion_mlp_v2, batch_tile=128))
    y = jax.block_until_ready(fwd(x, t, padded_params))

    y_ref = _reference(x, t, params)
    assert y.shape == (B, INPUT_DIM)
    max_err = jnp.max(jnp.abs(y - y_ref))
    # bf16 MXU inputs with fp32 accumulation -> tolerance relaxed vs pure fp32.
    assert jnp.allclose(y, y_ref, atol=2e-2, rtol=2e-2), (
        f"mismatch vs reference, max|diff|={max_err}")

    print("KERNEL_OK")
</pallas_src>

<mosaic_0001>
module attributes {stable_mosaic.version = 11 : i64} {
  func.func @_mlp_kernel(%arg0: i32, %arg1: memref<128x128xbf16, #tpu.memory_space<vmem>>, %arg2: memref<128x1xf32, #tpu.memory_space<vmem>>, %arg3: memref<128x256xbf16, #tpu.memory_space<vmem>>, %arg4: memref<1x256xf32, #tpu.memory_space<vmem>>, %arg5: memref<1x256xf32, #tpu.memory_space<vmem>>, %arg6: memref<256x256xbf16, #tpu.memory_space<vmem>>, %arg7: memref<1x256xf32, #tpu.memory_space<vmem>>, %arg8: memref<256x256xbf16, #tpu.memory_space<vmem>>, %arg9: memref<1x256xf32, #tpu.memory_space<vmem>>, %arg10: memref<256x128xbf16, #tpu.memory_space<vmem>>, %arg11: memref<1x128xf32, #tpu.memory_space<vmem>>, %arg12: memref<128x128xf32, #tpu.memory_space<vmem>>) attributes {dimension_semantics = [#tpu.dimension_semantics<parallel>], iteration_bounds = array<i64: 2>, scalar_prefetch = 0 : i64, scratch_operands = 0 : i64, tpu.core_type = #tpu.core_type<tc>, window_params = [{transform_indices = @transform_0, window_bounds = array<i64: 128, 128>}, {transform_indices = @transform_1, window_bounds = array<i64: 128, 1>}, {pipeline_mode = #tpu.pipeline_mode<synchronous>, transform_indices = @transform_2, window_bounds = array<i64: 128, 256>}, {pipeline_mode = #tpu.pipeline_mode<synchronous>, transform_indices = @transform_3, window_bounds = array<i64: 1, 256>}, {pipeline_mode = #tpu.pipeline_mode<synchronous>, transform_indices = @transform_4, window_bounds = array<i64: 1, 256>}, {pipeline_mode = #tpu.pipeline_mode<synchronous>, transform_indices = @transform_5, window_bounds = array<i64: 256, 256>}, {pipeline_mode = #tpu.pipeline_mode<synchronous>, transform_indices = @transform_6, window_bounds = array<i64: 1, 256>}, {pipeline_mode = #tpu.pipeline_mode<synchronous>, transform_indices = @transform_7, window_bounds = array<i64: 256, 256>}, {pipeline_mode = #tpu.pipeline_mode<synchronous>, transform_indices = @transform_8, window_bounds = array<i64: 1, 256>}, {pipeline_mode = #tpu.pipeline_mode<synchronous>, transform_indices = @transform_9, window_bounds = array<i64: 256, 128>}, {pipeline_mode = #tpu.pipeline_mode<synchronous>, transform_indices = @transform_10, window_bounds = array<i64: 1, 128>}, {transform_indices = @transform_11, window_bounds = array<i64: 128, 128>}]} {
    %c0 = arith.constant 0 : index
    %c0_0 = arith.constant 0 : index
    %0 = vector.load %arg1[%c0, %c0_0] : memref<128x128xbf16, #tpu.memory_space<vmem>>, vector<128x128xbf16>
    %c0_1 = arith.constant 0 : index
    %c0_2 = arith.constant 0 : index
    %1 = vector.load %arg3[%c0_1, %c0_2] : memref<128x256xbf16, #tpu.memory_space<vmem>>, vector<128x256xbf16>
    %cst = arith.constant dense<0.000000e+00> : vector<128x256xf32>
    %2 = tpu.matmul %0, %1, %cst {dimension_numbers = #tpu.dot_dimension_numbers<[1], [0], [0], [1], [0, 0, 1, 1], [], []>} : vector<128x128xbf16>, vector<128x256xbf16>, vector<128x256xf32> -> vector<128x256xf32>
    %c0_3 = arith.constant 0 : index
    %c0_4 = arith.constant 0 : index
    %3 = vector.load %arg2[%c0_3, %c0_4] : memref<128x1xf32, #tpu.memory_space<vmem>>, vector<128x1xf32>
    %c0_5 = arith.constant 0 : index
    %c0_6 = arith.constant 0 : index
    %4 = vector.load %arg4[%c0_5, %c0_6] : memref<1x256xf32, #tpu.memory_space<vmem>>, vector<1x256xf32>
    %5 = vector.broadcast %3 : vector<128x1xf32> to vector<128x256xf32>
    %6 = vector.broadcast %4 : vector<1x256xf32> to vector<128x256xf32>
    %7 = arith.mulf %5, %6 : vector<128x256xf32>
    %8 = arith.addf %2, %7 : vector<128x256xf32>
    %c0_7 = arith.constant 0 : index
    %c0_8 = arith.constant 0 : index
    %9 = vector.load %arg5[%c0_7, %c0_8] : memref<1x256xf32, #tpu.memory_space<vmem>>, vector<1x256xf32>
    %10 = vector.broadcast %9 : vector<1x256xf32> to vector<128x256xf32>
    %11 = arith.addf %8, %10 : vector<128x256xf32>
    %cst_9 = arith.constant 0.000000e+00 : f32
    %12 = vector.broadcast %cst_9 : f32 to vector<128x256xf32>
    %13 = arith.maximumf %11, %12 : vector<128x256xf32>
    %14 = arith.truncf %13 : vector<128x256xf32> to vector<128x256xbf16>
    %c0_10 = arith.constant 0 : index
    %c0_11 = arith.constant 0 : index
    %15 = vector.load %arg6[%c0_10, %c0_11] : memref<256x256xbf16, #tpu.memory_space<vmem>>, vector<256x256xbf16>
    %cst_12 = arith.constant dense<0.000000e+00> : vector<128x256xf32>
    %16 = tpu.matmul %14, %15, %cst_12 {dimension_numbers = #tpu.dot_dimension_numbers<[1], [0], [0], [1], [0, 0, 1, 1], [], []>} : vector<128x256xbf16>, vector<256x256xbf16>, vector<128x256xf32> -> vector<128x256xf32>
    %c0_13 = arith.constant 0 : index
    %c0_14 = arith.constant 0 : index
    %17 = vector.load %arg7[%c0_13, %c0_14] : memref<1x256xf32, #tpu.memory_space<vmem>>, vector<1x256xf32>
    %18 = vector.broadcast %17 : vector<1x256xf32> to vector<128x256xf32>
    %19 = arith.addf %16, %18 : vector<128x256xf32>
    %cst_15 = arith.constant 0.000000e+00 : f32
    %20 = vector.broadcast %cst_15 : f32 to vector<128x256xf32>
    %21 = arith.maximumf %19, %20 : vector<128x256xf32>
    %22 = arith.truncf %21 : vector<128x256xf32> to vector<128x256xbf16>
    %c0_16 = arith.constant 0 : index
    %c0_17 = arith.constant 0 : index
    %23 = vector.load %arg8[%c0_16, %c0_17] : memref<256x256xbf16, #tpu.memory_space<vmem>>, vector<256x256xbf16>
    %cst_18 = arith.constant dense<0.000000e+00> : vector<128x256xf32>
    %24 = tpu.matmul %22, %23, %cst_18 {dimension_numbers = #tpu.dot_dimension_numbers<[1], [0], [0], [1], [0, 0, 1, 1], [], []>} : vector<128x256xbf16>, vector<256x256xbf16>, vector<128x256xf32> -> vector<128x256xf32>
    %c0_19 = arith.constant 0 : index
    %c0_20 = arith.constant 0 : index
    %25 = vector.load %arg9[%c0_19, %c0_20] : memref<1x256xf32, #tpu.memory_space<vmem>>, vector<1x256xf32>
    %26 = vector.broadcast %25 : vector<1x256xf32> to vector<128x256xf32>
    %27 = arith.addf %24, %26 : vector<128x256xf32>
    %cst_21 = arith.constant 0.000000e+00 : f32
    %28 = vector.broadcast %cst_21 : f32 to vector<128x256xf32>
    %29 = arith.maximumf %27, %28 : vector<128x256xf32>
    %30 = arith.truncf %29 : vector<128x256xf32> to vector<128x256xbf16>
    %c0_22 = arith.constant 0 : index
    %c0_23 = arith.constant 0 : index
    %31 = vector.load %arg10[%c0_22, %c0_23] : memref<256x128xbf16, #tpu.memory_space<vmem>>, vector<256x128xbf16>
    %cst_24 = arith.constant dense<0.000000e+00> : vector<128x128xf32>
    %32 = tpu.matmul %30, %31, %cst_24 {dimension_numbers = #tpu.dot_dimension_numbers<[1], [0], [0], [1], [0, 0, 1, 1], [], []>} : vector<128x256xbf16>, vector<256x128xbf16>, vector<128x128xf32> -> vector<128x128xf32>
    %c0_25 = arith.constant 0 : index
    %c0_26 = arith.constant 0 : index
    %33 = vector.load %arg11[%c0_25, %c0_26] : memref<1x128xf32, #tpu.memory_space<vmem>>, vector<1x128xf32>
    %34 = vector.broadcast %33 : vector<1x128xf32> to vector<128x128xf32>
    %35 = arith.addf %32, %34 : vector<128x128xf32>
    %c0_27 = arith.constant 0 : index
    %c0_28 = arith.constant 0 : index
    %36 = vector.load %arg12[%c0_27, %c0_28] : memref<128x128xf32, #tpu.memory_space<vmem>>, vector<128x128xf32>
    tpu.vector_store %arg12[%c0_27, %c0_28], %35 {strides = array<i32>} : memref<128x128xf32, #tpu.memory_space<vmem>>, vector<128x128xf32>,
    return
  }
  func.func @transform_0(%arg0: i32) -> (i32, i32) {
    %c0_i32 = arith.constant 0 : i32
    %c0_i32_0 = arith.constant 0 : i32
    return %arg0, %c0_i32 : i32, i32
  }
  func.func @transform_1(%arg0: i32) -> (i32, i32) {
    %c0_i32 = arith.constant 0 : i32
    %c0_i32_0 = arith.constant 0 : i32
    return %arg0, %c0_i32 : i32, i32
  }
  func.func @transform_2(%arg0: i32) -> (i32, i32) {
    %c0_i32 = arith.constant 0 : i32
    %c0_i32_0 = arith.constant 0 : i32
    %c0_i32_1 = arith.constant 0 : i32
    return %c0_i32, %c0_i32_0 : i32, i32
  }
  func.func @transform_3(%arg0: i32) -> (i32, i32) {
    %c0_i32 = arith.constant 0 : i32
    %c0_i32_0 = arith.constant 0 : i32
    %c0_i32_1 = arith.constant 0 : i32
    return %c0_i32, %c0_i32_0 : i32, i32
  }
  func.func @transform_4(%arg0: i32) -> (i32, i32) {
    %c0_i32 = arith.constant 0 : i32
    %c0_i32_0 = arith.constant 0 : i32
    %c0_i32_1 = arith.constant 0 : i32
    return %c0_i32, %c0_i32_0 : i32, i32
  }
  func.func @transform_5(%arg0: i32) -> (i32, i32) {
    %c0_i32 = arith.constant 0 : i32
    %c0_i32_0 = arith.constant 0 : i32
    %c0_i32_1 = arith.constant 0 : i32
    return %c0_i32, %c0_i32_0 : i32, i32
  }
  func.func @transform_6(%arg0: i32) -> (i32, i32) {
    %c0_i32 = arith.constant 0 : i32
    %c0_i32_0 = arith.constant 0 : i32
    %c0_i32_1 = arith.constant 0 : i32
    return %c0_i32, %c0_i32_0 : i32, i32
  }
  func.func @transform_7(%arg0: i32) -> (i32, i32) {
    %c0_i32 = arith.constant 0 : i32
    %c0_i32_0 = arith.constant 0 : i32
    %c0_i32_1 = arith.constant 0 : i32
    return %c0_i32, %c0_i32_0 : i32, i32
  }
  func.func @transform_8(%arg0: i32) -> (i32, i32) {
    %c0_i32 = arith.constant 0 : i32
    %c0_i32_0 = arith.constant 0 : i32
    %c0_i32_1 = arith.constant 0 : i32
    return %c0_i32, %c0_i32_0 : i32, i32
  }
  func.func @transform_9(%arg0: i32) -> (i32, i32) {
    %c0_i32 = arith.constant 0 : i32
    %c0_i32_0 = arith.constant 0 : i32
    %c0_i32_1 = arith.constant 0 : i32
    return %c0_i32, %c0_i32_0 : i32, i32
  }
  func.func @transform_10(%arg0: i32) -> (i32, i32) {
    %c0_i32 = arith.constant 0 : i32
    %c0_i32_0 = arith.constant 0 : i32
    %c0_i32_1 = arith.constant 0 : i32
    return %c0_i32, %c0_i32_0 : i32, i32
  }
  func.func @transform_11(%arg0: i32) -> (i32, i32) {
    %c0_i32 = arith.constant 0 : i32
    %c0_i32_0 = arith.constant 0 : i32
    return %arg0, %c0_i32 : i32, i32
  }
}

</mosaic_0001>

<llo_original>
// kernel: diffusion_mlp_v2.1
$region0: #{diffusion_mlp_v2.1}
  #allocation0 [shape = 'u32[]', space=smem, size = 0x4, offset = 0x4, fixed_abs, tag = 'smem constant byte address 0x4 - core index']
  #allocation1 [shape = 'u32[144,128]{1,0:T(1,128)}', space=vmem, size = 0x12000, scoped, tag = 'internal scratch']
  %s0 = inlined_call_operand.vmem [shape: bf16[256,128], index: 0, kind: input, shape index: {}]
  %s1 = inlined_call_operand.vmem [shape: f32[256,1], index: 1, kind: input, shape index: {}]
  %s2 = inlined_call_operand.vmem [shape: bf16[128,256], index: 2, kind: input, shape index: {}]
  %s3 = inlined_call_operand.vmem [shape: f32[1,256], index: 3, kind: input, shape index: {}]
  %s4 = inlined_call_operand.vmem [shape: f32[1,256], index: 4, kind: input, shape index: {}]
  %s5 = inlined_call_operand.vmem [shape: bf16[256,256], index: 5, kind: input, shape index: {}]
  %s6 = inlined_call_operand.vmem [shape: f32[1,256], index: 6, kind: input, shape index: {}]
  %s7 = inlined_call_operand.vmem [shape: bf16[256,256], index: 7, kind: input, shape index: {}]
  %s8 = inlined_call_operand.vmem [shape: f32[1,256], index: 8, kind: input, shape index: {}]
  %s9 = inlined_call_operand.hbm [shape: bf16[256,128], index: 9, kind: input, shape index: {}]
  %s10 = inlined_call_operand.vmem [shape: f32[1,128], index: 10, kind: input, shape index: {}]
  %s11 = inlined_call_operand.vmem [shape: f32[256,128], index: 11, kind: output, shape index: {}]
  %s12 = sld [smem:[#allocation0]]
  $region81: #{diffusion_mlp_v2.1} parent=0
    _
  %s14 = ssub.s32 1, %s12
  %s15 = scalar_select 0, %s14, %s12
  $region1: #{diffusion_mlp_v2.1} parent=0
    #allocation2 [shape = 'u8[65536]{0}', space=vmem, size = 0x10000, scoped, tag = 'input window, operand 9, single buffered']
    #allocation3 [shape = 's32[2]{0}', space=sflag, size = 0x8, scoped, tag = 'scoped memory for diffusion_mlp_v2.1']
    %16 = vsyncpa [#allocation3], 0
    loop: start=0, step=1, limit=4
    $region2: #{diffusion_mlp_v2.1} parent=1 // loop_pre_header
      _
    $region3: #{diffusion_mlp_v2.1} parent=1 // loop_header
      %s18 = sphi 0, %s22
      %p19 = scmp.ge.s32.totalorder %s18, 4
      %s28 = sphi 0, %s30
      %s31 = sphi 0, %s28
      %s32 = sphi 0, %s31
      %s48 = sphi 0, %s32
      %s54 = sphi 0, %s56
      %s57 = sphi 0, %s54
      %s58 = sphi 0, %s57
      %s74 = sphi 0, %s58
      %s78 = sphi 0, %s78
      %s80 = sphi 0, %s78
      %s81 = sphi 0, %s80
      %s95 = sphi 0, %s81
      %s99 = sphi 0, %s99
      %s101 = sphi 0, %s99
      %s102 = sphi 0, %s101
      %s116 = sphi 0, %s102
      %s120 = sphi 0, %s120
      %s122 = sphi 0, %s120
      %s123 = sphi 0, %s122
      %s137 = sphi 0, %s123
      %s141 = sphi 0, %s141
      %s143 = sphi 0, %s141
      %s144 = sphi 0, %s143
      %s158 = sphi 0, %s144
      %s162 = sphi 0, %s162
      %s164 = sphi 0, %s162
      %s165 = sphi 0, %s164
      %s179 = sphi 0, %s165
      %s183 = sphi 0, %s183
      %s185 = sphi 0, %s183
      %s186 = sphi 0, %s185
      %s200 = sphi 0, %s186
      %s204 = sphi 0, %s204
      %s206 = sphi 0, %s204
      %s207 = sphi 0, %s206
      %s221 = sphi 0, %s207
      %s225 = sphi 0, %s225
      %s227 = sphi 0, %s225
      %s228 = sphi 0, %s227
      %s242 = sphi 0, %s228
      %s246 = sphi 0, %s246
      %s248 = sphi 0, %s246
      %s249 = sphi 0, %s248
      %s263 = sphi 0, %s249
      %s269 = sphi 0, %s271
      %s272 = sphi 0, %s269
      %s273 = sphi 0, %s272
      %s289 = sphi 0, %s273
    $region4: #{diffusion_mlp_v2.1} parent=1 // loop_header_branch
      %21 = sbr.rel (%p19) target = $region8
    $region5: #{diffusion_mlp_v2.1} parent=1 // loop_body
      %s23 = ssub.s32 %s18, 1
      %s24 = ssub.s32 %s18, 2
      %s25 = sadd.s32 %s18, 1
      %s26 = ssub.s32 %s18, %s25
      %p27 = scmp.eq.s32.totalorder %s26, 0
      %s29 = sadd.s32 %s28, 1
      %s30 = scalar_select %p27, %s28, %s29
      %p33 = pneg %p27
      %p34 = scmp.eq.s32.totalorder %s18, 1
      %p35 = por %p33, %p34
      %p36 = scmp.ne.s32.totalorder %s28, %s31
      %p37 = scmp.eq.s32.totalorder %s18, 0
      %p38 = por %p36, %p37
      %p39 = scmp.ne.s32.totalorder %s28, %s31
      %p40 = scmp.eq.s32.totalorder %s23, 1
      %p41 = por %p39, %p40
      %p42 = scmp.ne.s32.totalorder %s31, %s32
      %p43 = scmp.eq.s32.totalorder %s23, 0
      %p44 = por %p42, %p43
      %p45 = scmp.ne.s32.totalorder %s31, %s32
      %p46 = scmp.eq.s32.totalorder %s24, 1
      %p47 = por %p45, %p46
      %p49 = scmp.ne.s32.totalorder %s32, %s48
      %p50 = scmp.eq.s32.totalorder %s24, 0
      %p51 = por %p49, %p50
      %s52 = ssub.s32 %s18, %s25
      %p53 = scmp.eq.s32.totalorder %s52, 0
      %s55 = sadd.s32 %s54, 1
      %s56 = scalar_select %p53, %s54, %s55
      %p59 = pneg %p53
      %p60 = scmp.eq.s32.totalorder %s18, 1
      %p61 = por %p59, %p60
      %p62 = scmp.ne.s32.totalorder %s54, %s57
      %p63 = scmp.eq.s32.totalorder %s18, 0
      %p64 = por %p62, %p63
      %p65 = scmp.ne.s32.totalorder %s54, %s57
      %p66 = scmp.eq.s32.totalorder %s23, 1
      %p67 = por %p65, %p66
      %p68 = scmp.ne.s32.totalorder %s57, %s58
      %p69 = scmp.eq.s32.totalorder %s23, 0
      %p70 = por %p68, %p69
      %p71 = scmp.ne.s32.totalorder %s57, %s58
      %p72 = scmp.eq.s32.totalorder %s24, 1
      %p73 = por %p71, %p72
      %p75 = scmp.ne.s32.totalorder %s58, %s74
      %p76 = scmp.eq.s32.totalorder %s24, 0
      %p77 = por %p75, %p76
      %s79 = sadd.s32 %s78, 1
      %p82 = scmp.eq.s32.totalorder %s18, 1
      %p83 = scmp.ne.s32.totalorder %s78, %s80
      %p84 = scmp.eq.s32.totalorder %s18, 0
      %p85 = por %p83, %p84
      %p86 = scmp.ne.s32.totalorder %s78, %s80
      %p87 = scmp.eq.s32.totalorder %s23, 1
      %p88 = por %p86, %p87
      %p89 = scmp.ne.s32.totalorder %s80, %s81
      %p90 = scmp.eq.s32.totalorder %s23, 0
      %p91 = por %p89, %p90
      %p92 = scmp.ne.s32.totalorder %s80, %s81
      %p93 = scmp.eq.s32.totalorder %s24, 1
      %p94 = por %p92, %p93
      %p96 = scmp.ne.s32.totalorder %s81, %s95
      %p97 = scmp.eq.s32.totalorder %s24, 0
      %p98 = por %p96, %p97
      %s100 = sadd.s32 %s99, 1
      %p103 = scmp.eq.s32.totalorder %s18, 1
      %p104 = scmp.ne.s32.totalorder %s99, %s101
      %p105 = scmp.eq.s32.totalorder %s18, 0
      %p106 = por %p104, %p105
      %p107 = scmp.ne.s32.totalorder %s99, %s101
      %p108 = scmp.eq.s32.totalorder %s23, 1
      %p109 = por %p107, %p108
      %p110 = scmp.ne.s32.totalorder %s101, %s102
      %p111 = scmp.eq.s32.totalorder %s23, 0
      %p112 = por %p110, %p111
      %p113 = scmp.ne.s32.totalorder %s101, %s102
      %p114 = scmp.eq.s32.totalorder %s24, 1
      %p115 = por %p113, %p114
      %p117 = scmp.ne.s32.totalorder %s102, %s116
      %p118 = scmp.eq.s32.totalorder %s24, 0
      %p119 = por %p117, %p118
      %s121 = sadd.s32 %s120, 1
      %p124 = scmp.eq.s32.totalorder %s18, 1
      %p125 = scmp.ne.s32.totalorder %s120, %s122
      %p126 = scmp.eq.s32.totalorder %s18, 0
      %p127 = por %p125, %p126
      %p128 = scmp.ne.s32.totalorder %s120, %s122
      %p129 = scmp.eq.s32.totalorder %s23, 1
      %p130 = por %p128, %p129
      %p131 = scmp.ne.s32.totalorder %s122, %s123
      %p132 = scmp.eq.s32.totalorder %s23, 0
      %p133 = por %p131, %p132
      %p134 = scmp.ne.s32.totalorder %s122, %s123
      %p135 = scmp.eq.s32.totalorder %s24, 1
      %p136 = por %p134, %p135
      %p138 = scmp.ne.s32.totalorder %s123, %s137
      %p139 = scmp.eq.s32.totalorder %s24, 0
      %p140 = por %p138, %p139
      %s142 = sadd.s32 %s141, 1
      %p145 = scmp.eq.s32.totalorder %s18, 1
      %p146 = scmp.ne.s32.totalorder %s141, %s143
      %p147 = scmp.eq.s32.totalorder %s18, 0
      %p148 = por %p146, %p147
      %p149 = scmp.ne.s32.totalorder %s141, %s143
      %p150 = scmp.eq.s32.totalorder %s23, 1
      %p151 = por %p149, %p150
      %p152 = scmp.ne.s32.totalorder %s143, %s144
      %p153 = scmp.eq.s32.totalorder %s23, 0
      %p154 = por %p152, %p153
      %p155 = scmp.ne.s32.totalorder %s143, %s144
      %p156 = scmp.eq.s32.totalorder %s24, 1
      %p157 = por %p155, %p156
      %p159 = scmp.ne.s32.totalorder %s144, %s158
      %p160 = scmp.eq.s32.totalorder %s24, 0
      %p161 = por %p159, %p160
      %s163 = sadd.s32 %s162, 1
      %p166 = scmp.eq.s32.totalorder %s18, 1
      %p167 = scmp.ne.s32.totalorder %s162, %s164
      %p168 = scmp.eq.s32.totalorder %s18, 0
      %p169 = por %p167, %p168
      %p170 = scmp.ne.s32.totalorder %s162, %s164
      %p171 = scmp.eq.s32.totalorder %s23, 1
      %p172 = por %p170, %p171
      %p173 = scmp.ne.s32.totalorder %s164, %s165
      %p174 = scmp.eq.s32.totalorder %s23, 0
      %p175 = por %p173, %p174
      %p176 = scmp.ne.s32.totalorder %s164, %s165
      %p177 = scmp.eq.s32.totalorder %s24, 1
      %p178 = por %p176, %p177
      %p180 = scmp.ne.s32.totalorder %s165, %s179
      %p181 = scmp.eq.s32.totalorder %s24, 0
      %p182 = por %p180, %p181
      %s184 = sadd.s32 %s183, 1
      %p187 = scmp.eq.s32.totalorder %s18, 1
      %p188 = scmp.ne.s32.totalorder %s183, %s185
      %p189 = scmp.eq.s32.totalorder %s18, 0
      %p190 = por %p188, %p189
      %p191 = scmp.ne.s32.totalorder %s183, %s185
      %p192 = scmp.eq.s32.totalorder %s23, 1
      %p193 = por %p191, %p192
      %p194 = scmp.ne.s32.totalorder %s185, %s186
      %p195 = scmp.eq.s32.totalorder %s23, 0
      %p196 = por %p194, %p195
      %p197 = scmp.ne.s32.totalorder %s185, %s186
      %p198 = scmp.eq.s32.totalorder %s24, 1
      %p199 = por %p197, %p198
      %p201 = scmp.ne.s32.totalorder %s186, %s200
      %p202 = scmp.eq.s32.totalorder %s24, 0
      %p203 = por %p201, %p202
      %s205 = sadd.s32 %s204, 1
      %p208 = scmp.eq.s32.totalorder %s18, 1
      %p209 = scmp.ne.s32.totalorder %s204, %s206
      %p210 = scmp.eq.s32.totalorder %s18, 0
      %p211 = por %p209, %p210
      %p212 = scmp.ne.s32.totalorder %s204, %s206
      %p213 = scmp.eq.s32.totalorder %s23, 1
      %p214 = por %p212, %p213
      %p215 = scmp.ne.s32.totalorder %s206, %s207
      %p216 = scmp.eq.s32.totalorder %s23, 0
      %p217 = por %p215, %p216
      %p218 = scmp.ne.s32.totalorder %s206, %s207
      %p219 = scmp.eq.s32.totalorder %s24, 1
      %p220 = por %p218, %p219
      %p222 = scmp.ne.s32.totalorder %s207, %s221
      %p223 = scmp.eq.s32.totalorder %s24, 0
      %p224 = por %p222, %p223
      %s226 = sadd.s32 %s225, 1
      %p229 = scmp.eq.s32.totalorder %s18, 1
      %p230 = scmp.ne.s32.totalorder %s225, %s227
      %p231 = scmp.eq.s32.totalorder %s18, 0
      %p232 = por %p230, %p231
      %p233 = scmp.ne.s32.totalorder %s225, %s227
      %p234 = scmp.eq.s32.totalorder %s23, 1
      %p235 = por %p233, %p234
      %p236 = scmp.ne.s32.totalorder %s227, %s228
      %p237 = scmp.eq.s32.totalorder %s23, 0
      %p238 = por %p236, %p237
      %p239 = scmp.ne.s32.totalorder %s227, %s228
      %p240 = scmp.eq.s32.totalorder %s24, 1
      %p241 = por %p239, %p240
      %p243 = scmp.ne.s32.totalorder %s228, %s242
      %p244 = scmp.eq.s32.totalorder %s24, 0
      %p245 = por %p243, %p244
      %s247 = sadd.s32 %s246, 1
      %p250 = scmp.eq.s32.totalorder %s18, 1
      %p251 = scmp.ne.s32.totalorder %s246, %s248
      %p252 = scmp.eq.s32.totalorder %s18, 0
      %p253 = por %p251, %p252
      %p254 = scmp.ne.s32.totalorder %s246, %s248
      %p255 = scmp.eq.s32.totalorder %s23, 1
      %p256 = por %p254, %p255
      %p257 = scmp.ne.s32.totalorder %s248, %s249
      %p258 = scmp.eq.s32.totalorder %s23, 0
      %p259 = por %p257, %p258
      %p260 = scmp.ne.s32.totalorder %s248, %s249
      %p261 = scmp.eq.s32.totalorder %s24, 1
      %p262 = por %p260, %p261
      %p264 = scmp.ne.s32.totalorder %s249, %s263
      %p265 = scmp.eq.s32.totalorder %s24, 0
      %p266 = por %p264, %p265
      %s267 = ssub.s32 %s18, %s25
      %p268 = scmp.eq.s32.totalorder %s267, 0
      %s270 = sadd.s32 %s269, 1
      %s271 = scalar_select %p268, %s269, %s270
      %p274 = pneg %p268
      %p275 = scmp.eq.s32.totalorder %s18, 1
      %p276 = por %p274, %p275
      %p277 = scmp.ne.s32.totalorder %s269, %s272
      %p278 = scmp.eq.s32.totalorder %s18, 0
      %p279 = por %p277, %p278
      %p280 = scmp.ne.s32.totalorder %s269, %s272
      %p281 = scmp.eq.s32.totalorder %s23, 1
      %p282 = por %p280, %p281
      %p283 = scmp.ne.s32.totalorder %s272, %s273
      %p284 = scmp.eq.s32.totalorder %s23, 0
      %p285 = por %p283, %p284
      %p286 = scmp.ne.s32.totalorder %s272, %s273
      %p287 = scmp.eq.s32.totalorder %s24, 1
      %p288 = por %p286, %p287
      %p290 = scmp.ne.s32.totalorder %s273, %s289
      %p291 = scmp.eq.s32.totalorder %s24, 0
      %p292 = por %p290, %p291
      %p293 = scmp.le.s32.totalorder 1, %s18
      %p294 = scmp.lt.s32.totalorder %s18, 3
      %p295 = pnand %p293, %p294
      %p296 = pneg %p295
      // Predicated region
      $region9: #{diffusion_mlp_v2.1} parent=5 // pred_check
        _
      $region10: #{diffusion_mlp_v2.1} parent=5 // pred_check_branch
        %298 = sbr.rel (%p295) target = $region12
      $region11: #{diffusion_mlp_v2.1} parent=5 // pred_region
        %s299 = ssub.s32 %s18, 1
        // Predicated region
        $region13: #{diffusion_mlp_v2.1} parent=11 // pred_check
          %p300 = pneg %p91
        $region14: #{diffusion_mlp_v2.1} parent=11 // pred_check_branch
          %302 = sbr.rel (%p300) target = $region16
        $region15: #{diffusion_mlp_v2.1} parent=11 // pred_region
          _
        $region16: #{diffusion_mlp_v2.1} parent=11 // pred_fallthru
          _
        // Predicated region
        $region17: #{diffusion_mlp_v2.1} parent=11 // pred_check
          %p303 = pneg %p112
        $region18: #{diffusion_mlp_v2.1} parent=11 // pred_check_branch
          %305 = sbr.rel (%p303) target = $region20
        $region19: #{diffusion_mlp_v2.1} parent=11 // pred_region
          _
        $region20: #{diffusion_mlp_v2.1} parent=11 // pred_fallthru
          _
        // Predicated region
        $region21: #{diffusion_mlp_v2.1} parent=11 // pred_check
          %p306 = pneg %p133
        $region22: #{diffusion_mlp_v2.1} parent=11 // pred_check_branch
          %308 = sbr.rel (%p306) target = $region24
        $region23: #{diffusion_mlp_v2.1} parent=11 // pred_region
          _
        $region24: #{diffusion_mlp_v2.1} parent=11 // pred_fallthru
          _
        // Predicated region
        $region25: #{diffusion_mlp_v2.1} parent=11 // pred_check
          %p309 = pneg %p154
        $region26: #{diffusion_mlp_v2.1} parent=11 // pred_check_branch
          %311 = sbr.rel (%p309) target = $region28
        $region27: #{diffusion_mlp_v2.1} parent=11 // pred_region
          _
        $region28: #{diffusion_mlp_v2.1} parent=11 // pred_fallthru
          _
        // Predicated region
        $region29: #{diffusion_mlp_v2.1} parent=11 // pred_check
          %p312 = pneg %p175
        $region30: #{diffusion_mlp_v2.1} parent=11 // pred_check_branch
          %314 = sbr.rel (%p312) target = $region32
        $region31: #{diffusion_mlp_v2.1} parent=11 // pred_region
          _
        $region32: #{diffusion_mlp_v2.1} parent=11 // pred_fallthru
          _
        // Predicated region
        $region33: #{diffusion_mlp_v2.1} parent=11 // pred_check
          %p315 = pneg %p196
        $region34: #{diffusion_mlp_v2.1} parent=11 // pred_check_branch
          %317 = sbr.rel (%p315) target = $region36
        $region35: #{diffusion_mlp_v2.1} parent=11 // pred_region
          _
        $region36: #{diffusion_mlp_v2.1} parent=11 // pred_fallthru
          _
        // Predicated region
        $region37: #{diffusion_mlp_v2.1} parent=11 // pred_check
          %p318 = pneg %p217
        $region38: #{diffusion_mlp_v2.1} parent=11 // pred_check_branch
          %320 = sbr.rel (%p318) target = $region40
        $region39: #{diffusion_mlp_v2.1} parent=11 // pred_region
          _
        $region40: #{diffusion_mlp_v2.1} parent=11 // pred_fallthru
          _
        // Predicated region
        $region41: #{diffusion_mlp_v2.1} parent=11 // pred_check
          %p321 = pneg %p238
        $region42: #{diffusion_mlp_v2.1} parent=11 // pred_check_branch
          %323 = sbr.rel (%p321) target = $region44
        $region43: #{diffusion_mlp_v2.1} parent=11 // pred_region
          %s325 = ssub.s32 2048, 2048
          %326 = vsyncadd [#allocation3], %s325
          %s327 = sshll.u32 [#allocation2], 4
          %s328 = int_to_ptr.vmem [resolvable:$true] %s327
          %333 = dma.hbm_to_vmem [thread:$0]  %s9, 2048, %s328, [#allocation3], 64, 64, 4
        $region44: #{diffusion_mlp_v2.1} parent=11 // pred_fallthru
          _
        // Predicated region
        $region45: #{diffusion_mlp_v2.1} parent=11 // pred_check
          %p334 = pneg %p259
        $region46: #{diffusion_mlp_v2.1} parent=11 // pred_check_branch
          %336 = sbr.rel (%p334) target = $region48
        $region47: #{diffusion_mlp_v2.1} parent=11 // pred_region
          _
        $region48: #{diffusion_mlp_v2.1} parent=11 // pred_fallthru
          _
      $region12: #{diffusion_mlp_v2.1} parent=5 // pred_fallthru
        _
      %p337 = scmp.lt.s32.totalorder %s18, 2
      // Predicated region
      $region49: #{diffusion_mlp_v2.1} parent=5 // pred_check
        %p338 = pneg %p337
      $region50: #{diffusion_mlp_v2.1} parent=5 // pred_check_branch
        %340 = sbr.rel (%p338) target = $region52
      $region51: #{diffusion_mlp_v2.1} parent=5 // pred_region
        // Predicated region
        $region53: #{diffusion_mlp_v2.1} parent=51 // pred_check
          %p341 = pneg %p38
        $region54: #{diffusion_mlp_v2.1} parent=51 // pred_check_branch
          %343 = sbr.rel (%p341) target = $region56
        $region55: #{diffusion_mlp_v2.1} parent=51 // pred_region
          %s344 = smul.u32 16, %s18
          %p345 = scmp.lt.s32.totalorder %s344, 31
          %s346 = scalar_select %p345, %s344, 31
          %s347 = smul.addr %s346, 4
          %s348 = scalar_lea.vmem %s0, %s347
          %s349 = smul.u32 16, %s18
        $region56: #{diffusion_mlp_v2.1} parent=51 // pred_fallthru
          _
        // Predicated region
        $region57: #{diffusion_mlp_v2.1} parent=51 // pred_check
          %p350 = pneg %p64
        $region58: #{diffusion_mlp_v2.1} parent=51 // pred_check_branch
          %352 = sbr.rel (%p350) target = $region60
        $region59: #{diffusion_mlp_v2.1} parent=51 // pred_region
          %s353 = smul.u32 16, %s18
          %p354 = scmp.lt.s32.totalorder %s353, 31
          %s355 = scalar_select %p354, %s353, 31
          %s356 = smul.addr %s355, 8
          %s357 = scalar_lea.vmem %s1, %s356
          %s358 = smul.u32 16, %s18
        $region60: #{diffusion_mlp_v2.1} parent=51 // pred_fallthru
          _
      $region52: #{diffusion_mlp_v2.1} parent=5 // pred_fallthru
        _
      %p359 = scmp.le.s32.totalorder 1, %s18
      %p360 = scmp.lt.s32.totalorder %s18, 3
      %p361 = pnand %p359, %p360
      %p362 = pneg %p361
      // Predicated region
      $region61: #{diffusion_mlp_v2.1} parent=5 // pred_check
        _
      $region62: #{diffusion_mlp_v2.1} parent=5 // pred_check_branch
        %364 = sbr.rel (%p361) target = $region64
      $region63: #{diffusion_mlp_v2.1} parent=5 // pred_region
        %s365 = ssub.s32 %s18, 1
        // Predicated region
        $region65: #{diffusion_mlp_v2.1} parent=63 // pred_check
          %p366 = pneg %p238
        $region66: #{diffusion_mlp_v2.1} parent=63 // pred_check_branch
          %368 = sbr.rel (%p366) target = $region68
        $region67: #{diffusion_mlp_v2.1} parent=63 // pred_region
          %369 = dma.done [#allocation3], 2048
        $region68: #{diffusion_mlp_v2.1} parent=63 // pred_fallthru
          _
        %s370 = smul.u32 16, %s23
        %p371 = scmp.lt.s32.totalorder %s370, 31
        %s372 = scalar_select %p371, %s370, 31
        %s373 = smul.addr %s372, 4
        %s374 = scalar_lea.vmem %s0, %s373
        %p375 = pneg %p44
        %p376 = pneg %p41
        %s377 = smul.u32 16, %s23
        %p378 = scmp.lt.s32.totalorder %s377, 31
        %s379 = scalar_select %p378, %s377, 31
        %s380 = smul.addr %s379, 8
        %s381 = scalar_lea.vmem %s1, %s380
        %p382 = pneg %p70
        %p383 = pneg %p67
        %p384 = pneg %p91
        %p385 = pneg %p88
        %p386 = pneg %p112
        %p387 = pneg %p109
        %p388 = pneg %p133
        %p389 = pneg %p130
        %p390 = pneg %p154
        %p391 = pneg %p151
        %p392 = pneg %p175
        %p393 = pneg %p172
        %p394 = pneg %p196
        %p395 = pneg %p193
        %p396 = pneg %p217
        %p397 = pneg %p214
        %p398 = pneg %p238
        %p399 = pneg %p235
        %p400 = pneg %p259
        %p401 = pneg %p256
        %p402 = pneg %p285
        %p403 = pneg %p282
        %s404 = smul.u32 16, %s23
        %p405 = scmp.lt.s32.totalorder %s404, 31
        %s406 = scalar_select %p405, %s404, 31
        %s407 = smul.addr %s406, 8
        %s408 = scalar_lea.vmem %s11, %s407
        %s409 = smul.u32 16, %s23
        %p410 = scmp.lt.s32.totalorder %s409, 31
        %s411 = scalar_select %p410, %s409, 31
        %s412 = smul.addr %s411, 4
        %s413 = scalar_lea.vmem %s0, %s412
        %s414 = smul.u32 16, %s23
        %s415 = smul.u32 16, %s23
        %p416 = scmp.lt.s32.totalorder %s415, 31
        %s417 = scalar_select %p416, %s415, 31
        %s418 = smul.addr %s417, 8
        %s419 = scalar_lea.vmem %s1, %s418
        %s420 = smul.u32 16, %s23
        %s421 = smul.u32 16, %s23
        %p422 = scmp.lt.s32.totalorder %s421, 31
        %s423 = scalar_select %p422, %s421, 31
        %s424 = smul.addr %s423, 8
        %s425 = scalar_lea.vmem %s11, %s424
        %s426 = smul.u32 16, %s23
        %v428 = vld [vmem:[%s413] sm:$0xf]
        %v429 = vld [vmem:[%s413 + $0x4] sm:$0xf]
        %v430 = vld [vmem:[%s413 + $0x8] sm:$0xf]
        %v431 = vld [vmem:[%s413 + $0xc] sm:$0xf]
        %v432 = vld [vmem:[%s413 + $0x10] sm:$0xf]
        %v433 = vld [vmem:[%s413 + $0x14] sm:$0xf]
        %v434 = vld [vmem:[%s413 + $0x18] sm:$0xf]
        %v435 = vld [vmem:[%s413 + $0x1c] sm:$0xf]
        %v436 = vld [vmem:[%s413 + $0x20] sm:$0xf]
        %v437 = vld [vmem:[%s413 + $0x24] sm:$0xf]
        %v438 = vld [vmem:[%s413 + $0x28] sm:$0xf]
        %v439 = vld [vmem:[%s413 + $0x2c] sm:$0xf]
        %v440 = vld [vmem:[%s413 + $0x30] sm:$0xf]
        %v441 = vld [vmem:[%s413 + $0x34] sm:$0xf]
        %v442 = vld [vmem:[%s413 + $0x38] sm:$0xf]
        %v443 = vld [vmem:[%s413 + $0x3c] sm:$0xf]
        %v444 = vld [vmem:[%s2] sm:$0xff]
        %v445 = vld [vmem:[%s2 + $0x8] sm:$0xff]
        %v446 = vld [vmem:[%s2 + $0x10] sm:$0xff]
        %v447 = vld [vmem:[%s2 + $0x18] sm:$0xff]
        %v448 = vld [vmem:[%s2 + $0x20] sm:$0xff]
        %v449 = vld [vmem:[%s2 + $0x28] sm:$0xff]
        %v450 = vld [vmem:[%s2 + $0x30] sm:$0xff]
        %v451 = vld [vmem:[%s2 + $0x38] sm:$0xff]
        %v452 = vld [vmem:[%s2 + $0x40] sm:$0xff]
        %v453 = vld [vmem:[%s2 + $0x48] sm:$0xff]
        %v454 = vld [vmem:[%s2 + $0x50] sm:$0xff]
        %v455 = vld [vmem:[%s2 + $0x58] sm:$0xff]
        %v456 = vld [vmem:[%s2 + $0x60] sm:$0xff]
        %v457 = vld [vmem:[%s2 + $0x68] sm:$0xff]
        %v458 = vld [vmem:[%s2 + $0x70] sm:$0xff]
        %v459 = vld [vmem:[%s2 + $0x78] sm:$0xff]
        %v460 = vld [vmem:[%s419] sm:$0xff]
        %v461 = vld [vmem:[%s419 + $0x8] sm:$0xff]
        %v462 = vld [vmem:[%s419 + $0x10] sm:$0xff]
        %v463 = vld [vmem:[%s419 + $0x18] sm:$0xff]
        %v464 = vld [vmem:[%s419 + $0x20] sm:$0xff]
        %v465 = vld [vmem:[%s419 + $0x28] sm:$0xff]
        %v466 = vld [vmem:[%s419 + $0x30] sm:$0xff]
        %v467 = vld [vmem:[%s419 + $0x38] sm:$0xff]
        %v468 = vld [vmem:[%s419 + $0x40] sm:$0xff]
        %v469 = vld [vmem:[%s419 + $0x48] sm:$0xff]
        %v470 = vld [vmem:[%s419 + $0x50] sm:$0xff]
        %v471 = vld [vmem:[%s419 + $0x58] sm:$0xff]
        %v472 = vld [vmem:[%s419 + $0x60] sm:$0xff]
        %v473 = vld [vmem:[%s419 + $0x68] sm:$0xff]
        %v474 = vld [vmem:[%s419 + $0x70] sm:$0xff]
        %v475 = vld [vmem:[%s419 + $0x78] sm:$0xff]
        %v476 = vld [vmem:[%s3] sm:$0x3]
        %478 = vset.pattern.permute.xlu0 0
        %479 = vperm.xlu0 %478, %v460
        %v480 = vpop.permute.xlu0 %479
        %483 = vset.pattern.permute.xlu0 0
        %484 = vperm.xlu0 %483, %v461
        %v485 = vpop.permute.xlu0 %484
        %488 = vset.pattern.permute.xlu0 0
        %489 = vperm.xlu0 %488, %v462
        %v490 = vpop.permute.xlu0 %489
        %493 = vset.pattern.permute.xlu0 0
        %494 = vperm.xlu0 %493, %v463
        %v495 = vpop.permute.xlu0 %494
        %498 = vset.pattern.permute.xlu0 0
        %499 = vperm.xlu0 %498, %v464
        %v500 = vpop.permute.xlu0 %499
        %503 = vset.pattern.permute.xlu0 0
        %504 = vperm.xlu0 %503, %v465
        %v505 = vpop.permute.xlu0 %504
        %508 = vset.pattern.permute.xlu0 0
        %509 = vperm.xlu0 %508, %v466
        %v510 = vpop.permute.xlu0 %509
        %513 = vset.pattern.permute.xlu0 0
        %514 = vperm.xlu0 %513, %v467
        %v515 = vpop.permute.xlu0 %514
        %518 = vset.pattern.permute.xlu0 0
        %519 = vperm.xlu0 %518, %v468
        %v520 = vpop.permute.xlu0 %519
        %523 = vset.pattern.permute.xlu0 0
        %524 = vperm.xlu0 %523, %v469
        %v525 = vpop.permute.xlu0 %524
        %528 = vset.pattern.permute.xlu0 0
        %529 = vperm.xlu0 %528, %v470
        %v530 = vpop.permute.xlu0 %529
        %533 = vset.pattern.permute.xlu0 0
        %534 = vperm.xlu0 %533, %v471
        %v535 = vpop.permute.xlu0 %534
        %538 = vset.pattern.permute.xlu0 0
        %539 = vperm.xlu0 %538, %v472
        %v540 = vpop.permute.xlu0 %539
        %543 = vset.pattern.permute.xlu0 0
        %544 = vperm.xlu0 %543, %v473
        %v545 = vpop.permute.xlu0 %544
        %548 = vset.pattern.permute.xlu0 0
        %549 = vperm.xlu0 %548, %v474
        %v550 = vpop.permute.xlu0 %549
        %553 = vset.pattern.permute.xlu0 0
        %554 = vperm.xlu0 %553, %v475
        %v555 = vpop.permute.xlu0 %554
        %v558 = vlaneseq
        %v559 = vshrl.u32 %v558, 7
        %v560 = vsub.s32 0, %v559
        %v561 = vrot.slane %v476, %v560
        %v562 = vlaneseq
        %v563 = vshrl.u32 %v562, 7
        %v564 = vsub.s32 1, %v563
        %v565 = vrot.slane %v476, %v564
        %v568 = vmul.f32 %v480, %v561
        %v569 = vmul.f32 %v480, %v565
        %v570 = vmul.f32 %v485, %v561
        %v571 = vmul.f32 %v485, %v565
        %v572 = vmul.f32 %v490, %v561
        %v573 = vmul.f32 %v490, %v565
        %v574 = vmul.f32 %v495, %v561
        %v575 = vmul.f32 %v495, %v565
        %v576 = vmul.f32 %v500, %v561
        %v577 = vmul.f32 %v500, %v565
        %v578 = vmul.f32 %v505, %v561
        %v579 = vmul.f32 %v505, %v565
        %v580 = vmul.f32 %v510, %v561
        %v581 = vmul.f32 %v510, %v565
        %v582 = vmul.f32 %v515, %v561
        %v583 = vmul.f32 %v515, %v565
        %v584 = vmul.f32 %v520, %v561
        %v585 = vmul.f32 %v520, %v565
        %v586 = vmul.f32 %v525, %v561
        %v587 = vmul.f32 %v525, %v565
        %v588 = vmul.f32 %v530, %v561
        %v589 = vmul.f32 %v530, %v565
        %v590 = vmul.f32 %v535, %v561
        %v591 = vmul.f32 %v535, %v565
        %v592 = vmul.f32 %v540, %v561
        %v593 = vmul.f32 %v540, %v565
        %v594 = vmul.f32 %v545, %v561
        %v595 = vmul.f32 %v545, %v565
        %v596 = vmul.f32 %v550, %v561
        %v597 = vmul.f32 %v550, %v565
        %v598 = vmul.f32 %v555, %v561
        %v599 = vmul.f32 %v555, %v565
        %v616 = vunpack.c.l.b16 %v428
        %v617 = vunpack.c.l.b16 %v429
        %v618 = vunpack.c.l.b16 %v430
        %v619 = vunpack.c.l.b16 %v431
        %v620 = vunpack.c.l.b16 %v432
        %v621 = vunpack.c.l.b16 %v433
        %v622 = vunpack.c.l.b16 %v434
        %v623 = vunpack.c.l.b16 %v435
        %v624 = vunpack.c.l.b16 %v436
        %v625 = vunpack.c.l.b16 %v437
        %v626 = vunpack.c.l.b16 %v438
        %v627 = vunpack.c.l.b16 %v439
        %v628 = vunpack.c.l.b16 %v440
        %v629 = vunpack.c.l.b16 %v441
        %v630 = vunpack.c.l.b16 %v442
        %v631 = vunpack.c.l.b16 %v443
        %v632 = vpack.c.b16 %v617, %v616
        %v633 = vpack.c.b16 %v619, %v618
        %v634 = vpack.c.b16 %v621, %v620
        %v635 = vpack.c.b16 %v623, %v622
        %v636 = vpack.c.b16 %v625, %v624
        %v637 = vpack.c.b16 %v627, %v626
        %v638 = vpack.c.b16 %v629, %v628
        %v639 = vpack.c.b16 %v631, %v630
        %v664 = vunpack.c.l.b16 %v444
        %v665 = vunpack.c.h.b16 %v444
        %v666 = vunpack.c.l.b16 %v445
        %v667 = vunpack.c.h.b16 %v445
        %v668 = vunpack.c.l.b16 %v446
        %v669 = vunpack.c.h.b16 %v446
        %v670 = vunpack.c.l.b16 %v447
        %v671 = vunpack.c.h.b16 %v447
        %v672 = vunpack.c.l.b16 %v448
        %v673 = vunpack.c.h.b16 %v448
        %v674 = vunpack.c.l.b16 %v449
        %v675 = vunpack.c.h.b16 %v449
        %v676 = vunpack.c.l.b16 %v450
        %v677 = vunpack.c.h.b16 %v450
        %v678 = vunpack.c.l.b16 %v451
        %v679 = vunpack.c.h.b16 %v451
        %v680 = vunpack.c.l.b16 %v452
        %v681 = vunpack.c.h.b16 %v452
        %v682 = vunpack.c.l.b16 %v453
        %v683 = vunpack.c.h.b16 %v453
        %v684 = vunpack.c.l.b16 %v454
        %v685 = vunpack.c.h.b16 %v454
        %v686 = vunpack.c.l.b16 %v455
        %v687 = vunpack.c.h.b16 %v455
        %v688 = vunpack.c.l.b16 %v456
        %v689 = vunpack.c.h.b16 %v456
        %v690 = vunpack.c.l.b16 %v457
        %v691 = vunpack.c.h.b16 %v457
        %v692 = vunpack.c.l.b16 %v458
        %v693 = vunpack.c.h.b16 %v458
        %v694 = vunpack.c.l.b16 %v459
        %v695 = vunpack.c.h.b16 %v459
        %v696 = vpack.c.b16 %v666, %v664
        %v697 = vpack.c.b16 %v667, %v665
        %v698 = vpack.c.b16 %v670, %v668
        %v699 = vpack.c.b16 %v671, %v669
        %v700 = vpack.c.b16 %v674, %v672
        %v701 = vpack.c.b16 %v675, %v673
        %v702 = vpack.c.b16 %v678, %v676
        %v703 = vpack.c.b16 %v679, %v677
        %v704 = vpack.c.b16 %v682, %v680
        %v705 = vpack.c.b16 %v683, %v681
        %v706 = vpack.c.b16 %v686, %v684
        %v707 = vpack.c.b16 %v687, %v685
        %v708 = vpack.c.b16 %v690, %v688
        %v709 = vpack.c.b16 %v691, %v689
        %v710 = vpack.c.b16 %v694, %v692
        %v711 = vpack.c.b16 %v695, %v693
        %728 = vmatprep.subr.bf16.mxu0 %v711
        %729 = vmatpush1.bf16.msra.mxu0 %v710
        %730 = vmatprep.subr.bf16.mxu0 %v709
        %731 = vmatpush1.bf16.msra.mxu0 %v708
        %732 = vmatprep.subr.bf16.mxu0 %v707
        %733 = vmatpush1.bf16.msra.mxu0 %v706
        %734 = vmatprep.subr.bf16.mxu0 %v705
        %735 = vmatpush1.bf16.msra.mxu0 %v704
        %736 = vmatprep.subr.bf16.mxu0 %v703
        %737 = vmatpush1.bf16.msra.mxu0 %v702
        %738 = vmatprep.subr.bf16.mxu0 %v701
        %739 = vmatpush1.bf16.msra.mxu0 %v700
        %740 = vmatprep.subr.bf16.mxu0 %v699
        %741 = vmatpush1.bf16.msra.mxu0 %v698
        %742 = vmatprep.subr.bf16.mxu0 %v697
        %743 = vmatpush1.bf16.msra.mxu0 %v696
        %744 = vmatprep.subr.bf16.mxu0 0
        %745 = vmatpush2.bf16.msra.mxu0 0
        %746 = vmatprep.subr.bf16.mxu0 0
        %747 = vmatpush2.bf16.msra.mxu0 0
        %748 = vmatprep.subr.bf16.mxu0 0
        %749 = vmatpush2.bf16.msra.mxu0 0
        %750 = vmatprep.subr.bf16.mxu0 0
        %751 = vmatpush2.bf16.msra.mxu0 0
        %752 = vmatprep.subr.bf16.mxu0 0
        %753 = vmatpush2.bf16.msra.mxu0 0
        %754 = vmatprep.subr.bf16.mxu0 0
        %755 = vmatpush2.bf16.msra.mxu0 0
        %756 = vmatprep.subr.bf16.mxu0 0
        %757 = vmatpush2.bf16.msra.mxu0 0
        %758 = vmatprep.subr.bf16.mxu0 0
        %759 = vmatpush2.bf16.msra.mxu0 0
        %760 = vmatprep.mubr.bf16.mxu0 0
        %761 = vmatmul.mubr.bf16.gmra.mxu0 %v632
        %v762 = vpop.f32.mrf.mxu0
        %v763 = vadd.f32 %v568, %v762
        %v764 = vpop.f32.mrf.mxu0
        %v765 = vadd.f32 %v569, %v764
        %v766 = vpop.f32.mrf.mxu0
        %v767 = vadd.f32 %v570, %v766
        %v768 = vpop.f32.mrf.mxu0
        %v769 = vadd.f32 %v571, %v768
        %770 = vmatprep.mubr.bf16.mxu0 0
        %771 = vmatmul.mubr.bf16.gmra.mxu0 %v633
        %v772 = vpop.f32.mrf.mxu0
        %v773 = vadd.f32 %v572, %v772
        %v774 = vpop.f32.mrf.mxu0
        %v775 = vadd.f32 %v573, %v774
        %v776 = vpop.f32.mrf.mxu0
        %v777 = vadd.f32 %v574, %v776
        %v778 = vpop.f32.mrf.mxu0
        %v779 = vadd.f32 %v575, %v778
        %780 = vmatprep.mubr.bf16.mxu0 0
        %781 = vmatmul.mubr.bf16.gmra.mxu0 %v634
        %v782 = vpop.f32.mrf.mxu0
        %v783 = vadd.f32 %v576, %v782
        %v784 = vpop.f32.mrf.mxu0
        %v785 = vadd.f32 %v577, %v784
        %v786 = vpop.f32.mrf.mxu0
        %v787 = vadd.f32 %v578, %v786
        %v788 = vpop.f32.mrf.mxu0
        %v789 = vadd.f32 %v579, %v788
        %790 = vmatprep.mubr.bf16.mxu0 0
        %791 = vmatmul.mubr.bf16.gmra.mxu0 %v635
        %v792 = vpop.f32.mrf.mxu0
        %v793 = vadd.f32 %v580, %v792
        %v794 = vpop.f32.mrf.mxu0
        %v795 = vadd.f32 %v581, %v794
        %v796 = vpop.f32.mrf.mxu0
        %v797 = vadd.f32 %v582, %v796
        %v798 = vpop.f32.mrf.mxu0
        %v799 = vadd.f32 %v583, %v798
        %800 = vmatprep.mubr.bf16.mxu0 0
        %801 = vmatmul.mubr.bf16.gmra.mxu0 %v636
        %v802 = vpop.f32.mrf.mxu0
        %v803 = vadd.f32 %v584, %v802
        %v804 = vpop.f32.mrf.mxu0
        %v805 = vadd.f32 %v585, %v804
        %v806 = vpop.f32.mrf.mxu0
        %v807 = vadd.f32 %v586, %v806
        %v808 = vpop.f32.mrf.mxu0
        %v809 = vadd.f32 %v587, %v808
        %810 = vmatprep.mubr.bf16.mxu0 0
        %811 = vmatmul.mubr.bf16.gmra.mxu0 %v637
        %v812 = vpop.f32.mrf.mxu0
        %v813 = vadd.f32 %v588, %v812
        %v814 = vpop.f32.mrf.mxu0
        %v815 = vadd.f32 %v589, %v814
        %v816 = vpop.f32.mrf.mxu0
        %v817 = vadd.f32 %v590, %v816
        %v818 = vpop.f32.mrf.mxu0
        %v819 = vadd.f32 %v591, %v818
        %820 = vmatprep.mubr.bf16.mxu0 0
        %821 = vmatmul.mubr.bf16.gmra.mxu0 %v638
        %v822 = vpop.f32.mrf.mxu0
        %v823 = vadd.f32 %v592, %v822
        %v824 = vpop.f32.mrf.mxu0
        %v825 = vadd.f32 %v593, %v824
        %v826 = vpop.f32.mrf.mxu0
        %v827 = vadd.f32 %v594, %v826
        %v828 = vpop.f32.mrf.mxu0
        %v829 = vadd.f32 %v595, %v828
        %830 = vmatprep.mubr.bf16.mxu0 0
        %831 = vmatmul.mubr.bf16.gmra.mxu0 %v639
        %v832 = vpop.f32.mrf.mxu0
        %v833 = vadd.f32 %v596, %v832
        %v834 = vpop.f32.mrf.mxu0
        %v835 = vadd.f32 %v597, %v834
        %v836 = vpop.f32.mrf.mxu0
        %v837 = vadd.f32 %v598, %v836
        %v838 = vpop.f32.mrf.mxu0
        %v839 = vadd.f32 %v599, %v838
        %840 = vdwg.mxu0
        %v841 = vld [vmem:[%s4] sm:$0x3]
        %v843 = vlaneseq
        %v844 = vshrl.u32 %v843, 7
        %v845 = vsub.s32 0, %v844
        %v846 = vrot.slane %v841, %v845
        %v847 = vlaneseq
        %v848 = vshrl.u32 %v847, 7
        %v849 = vsub.s32 1, %v848
        %v850 = vrot.slane %v841, %v849
        %v853 = vadd.f32 %v763, %v846
        %v854 = vadd.f32 %v765, %v850
        %v855 = vadd.f32 %v767, %v846
        %v856 = vadd.f32 %v769, %v850
        %v857 = vadd.f32 %v773, %v846
        %v858 = vadd.f32 %v775, %v850
        %v859 = vadd.f32 %v777, %v846
        %v860 = vadd.f32 %v779, %v850
        %v861 = vadd.f32 %v783, %v846
        %v862 = vadd.f32 %v785, %v850
        %v863 = vadd.f32 %v787, %v846
        %v864 = vadd.f32 %v789, %v850
        %v865 = vadd.f32 %v793, %v846
        %v866 = vadd.f32 %v795, %v850
        %v867 = vadd.f32 %v797, %v846
        %v868 = vadd.f32 %v799, %v850
        %v869 = vadd.f32 %v803, %v846
        %v870 = vadd.f32 %v805, %v850
        %v871 = vadd.f32 %v807, %v846
        %v872 = vadd.f32 %v809, %v850
        %v873 = vadd.f32 %v813, %v846
        %v874 = vadd.f32 %v815, %v850
        %v875 = vadd.f32 %v817, %v846
        %v876 = vadd.f32 %v819, %v850
        %v877 = vadd.f32 %v823, %v846
        %v878 = vadd.f32 %v825, %v850
        %v879 = vadd.f32 %v827, %v846
        %v880 = vadd.f32 %v829, %v850
        %v881 = vadd.f32 %v833, %v846
        %v882 = vadd.f32 %v835, %v850
        %v883 = vadd.f32 %v837, %v846
        %v884 = vadd.f32 %v839, %v850
        %v885 = vmax.f32 %v853, 0.0
        %v886 = vmax.f32 %v854, 0.0
        %v887 = vmax.f32 %v855, 0.0
        %v888 = vmax.f32 %v856, 0.0
        %v889 = vmax.f32 %v857, 0.0
        %v890 = vmax.f32 %v858, 0.0
        %v891 = vmax.f32 %v859, 0.0
        %v892 = vmax.f32 %v860, 0.0
        %v893 = vmax.f32 %v861, 0.0
        %v894 = vmax.f32 %v862, 0.0
        %v895 = vmax.f32 %v863, 0.0
        %v896 = vmax.f32 %v864, 0.0
        %v897 = vmax.f32 %v865, 0.0
        %v898 = vmax.f32 %v866, 0.0
        %v899 = vmax.f32 %v867, 0.0
        %v900 = vmax.f32 %v868, 0.0
        %v901 = vmax.f32 %v869, 0.0
        %v902 = vmax.f32 %v870, 0.0
        %v903 = vmax.f32 %v871, 0.0
        %v904 = vmax.f32 %v872, 0.0
        %v905 = vmax.f32 %v873, 0.0
        %v906 = vmax.f32 %v874, 0.0
        %v907 = vmax.f32 %v875, 0.0
        %v908 = vmax.f32 %v876, 0.0
        %v909 = vmax.f32 %v877, 0.0
        %v910 = vmax.f32 %v878, 0.0
        %v911 = vmax.f32 %v879, 0.0
        %v912 = vmax.f32 %v880, 0.0
        %v913 = vmax.f32 %v881, 0.0
        %v914 = vmax.f32 %v882, 0.0
        %v915 = vmax.f32 %v883, 0.0
        %v916 = vmax.f32 %v884, 0.0
        %v917 = vpack.c.bf16 %v887, %v885
        %v918 = vpack.c.bf16 %v888, %v886
        %v919 = vpack.c.bf16 %v891, %v889
        %v920 = vpack.c.bf16 %v892, %v890
        %v921 = vpack.c.bf16 %v895, %v893
        %v922 = vpack.c.bf16 %v896, %v894
        %v923 = vpack.c.bf16 %v899, %v897
        %v924 = vpack.c.bf16 %v900, %v898
        %v925 = vpack.c.bf16 %v903, %v901
        %v926 = vpack.c.bf16 %v904, %v902
        %v927 = vpack.c.bf16 %v907, %v905
        %v928 = vpack.c.bf16 %v908, %v906
        %v929 = vpack.c.bf16 %v911, %v909
        %v930 = vpack.c.bf16 %v912, %v910
        %v931 = vpack.c.bf16 %v915, %v913
        %v932 = vpack.c.bf16 %v916, %v914
        %v933 = vld [vmem:[%s5] sm:$0xff]
        %v934 = vld [vmem:[%s5 + $0x8] sm:$0xff]
        %v935 = vld [vmem:[%s5 + $0x10] sm:$0xff]
        %v936 = vld [vmem:[%s5 + $0x18] sm:$0xff]
        %v937 = vld [vmem:[%s5 + $0x20] sm:$0xff]
        %v938 = vld [vmem:[%s5 + $0x28] sm:$0xff]
        %v939 = vld [vmem:[%s5 + $0x30] sm:$0xff]
        %v940 = vld [vmem:[%s5 + $0x38] sm:$0xff]
        %v941 = vld [vmem:[%s5 + $0x40] sm:$0xff]
        %v942 = vld [vmem:[%s5 + $0x48] sm:$0xff]
        %v943 = vld [vmem:[%s5 + $0x50] sm:$0xff]
        %v944 = vld [vmem:[%s5 + $0x58] sm:$0xff]
        %v945 = vld [vmem:[%s5 + $0x60] sm:$0xff]
        %v946 = vld [vmem:[%s5 + $0x68] sm:$0xff]
        %v947 = vld [vmem:[%s5 + $0x70] sm:$0xff]
        %v948 = vld [vmem:[%s5 + $0x78] sm:$0xff]
        %v949 = vld [vmem:[%s5 + $0x80] sm:$0xff]
        %v950 = vld [vmem:[%s5 + $0x88] sm:$0xff]
        %v951 = vld [vmem:[%s5 + $0x90] sm:$0xff]
        %v952 = vld [vmem:[%s5 + $0x98] sm:$0xff]
        %v953 = vld [vmem:[%s5 + $0xa0] sm:$0xff]
        %v954 = vld [vmem:[%s5 + $0xa8] sm:$0xff]
        %v955 = vld [vmem:[%s5 + $0xb0] sm:$0xff]
        %v956 = vld [vmem:[%s5 + $0xb8] sm:$0xff]
        %v957 = vld [vmem:[%s5 + $0xc0] sm:$0xff]
        %v958 = vld [vmem:[%s5 + $0xc8] sm:$0xff]
        %v959 = vld [vmem:[%s5 + $0xd0] sm:$0xff]
        %v960 = vld [vmem:[%s5 + $0xd8] sm:$0xff]
        %v961 = vld [vmem:[%s5 + $0xe0] sm:$0xff]
        %v962 = vld [vmem:[%s5 + $0xe8] sm:$0xff]
        %v963 = vld [vmem:[%s5 + $0xf0] sm:$0xff]
        %v964 = vld [vmem:[%s5 + $0xf8] sm:$0xff]
        %v965 = vld [vmem:[%s6] sm:$0x3]
        %v967 = vlaneseq
        %v968 = vshrl.u32 %v967, 7
        %v969 = vsub.s32 0, %v968
        %v970 = vrot.slane %v965, %v969
        %v971 = vlaneseq
        %v972 = vshrl.u32 %v971, 7
        %v973 = vsub.s32 1, %v972
        %v974 = vrot.slane %v965, %v973
        %v1009 = vunpack.c.l.b16 %v933
        %v1010 = vunpack.c.h.b16 %v933
        %v1011 = vunpack.c.l.b16 %v934
        %v1012 = vunpack.c.h.b16 %v934
        %v1013 = vunpack.c.l.b16 %v935
        %v1014 = vunpack.c.h.b16 %v935
        %v1015 = vunpack.c.l.b16 %v936
        %v1016 = vunpack.c.h.b16 %v936
        %v1017 = vunpack.c.l.b16 %v937
        %v1018 = vunpack.c.h.b16 %v937
        %v1019 = vunpack.c.l.b16 %v938
        %v1020 = vunpack.c.h.b16 %v938
        %v1021 = vunpack.c.l.b16 %v939
        %v1022 = vunpack.c.h.b16 %v939
        %v1023 = vunpack.c.l.b16 %v940
        %v1024 = vunpack.c.h.b16 %v940
        %v1025 = vunpack.c.l.b16 %v941
        %v1026 = vunpack.c.h.b16 %v941
        %v1027 = vunpack.c.l.b16 %v942
        %v1028 = vunpack.c.h.b16 %v942
        %v1029 = vunpack.c.l.b16 %v943
        %v1030 = vunpack.c.h.b16 %v943
        %v1031 = vunpack.c.l.b16 %v944
        %v1032 = vunpack.c.h.b16 %v944
        %v1033 = vunpack.c.l.b16 %v945
        %v1034 = vunpack.c.h.b16 %v945
        %v1035 = vunpack.c.l.b16 %v946
        %v1036 = vunpack.c.h.b16 %v946
        %v1037 = vunpack.c.l.b16 %v947
        %v1038 = vunpack.c.h.b16 %v947
        %v1039 = vunpack.c.l.b16 %v948
        %v1040 = vunpack.c.h.b16 %v948
        %v1041 = vunpack.c.l.b16 %v949
        %v1042 = vunpack.c.h.b16 %v949
        %v1043 = vunpack.c.l.b16 %v950
        %v1044 = vunpack.c.h.b16 %v950
        %v1045 = vunpack.c.l.b16 %v951
        %v1046 = vunpack.c.h.b16 %v951
        %v1047 = vunpack.c.l.b16 %v952
        %v1048 = vunpack.c.h.b16 %v952
        %v1049 = vunpack.c.l.b16 %v953
        %v1050 = vunpack.c.h.b16 %v953
        %v1051 = vunpack.c.l.b16 %v954
        %v1052 = vunpack.c.h.b16 %v954
        %v1053 = vunpack.c.l.b16 %v955
        %v1054 = vunpack.c.h.b16 %v955
        %v1055 = vunpack.c.l.b16 %v956
        %v1056 = vunpack.c.h.b16 %v956
        %v1057 = vunpack.c.l.b16 %v957
        %v1058 = vunpack.c.h.b16 %v957
        %v1059 = vunpack.c.l.b16 %v958
        %v1060 = vunpack.c.h.b16 %v958
        %v1061 = vunpack.c.l.b16 %v959
        %v1062 = vunpack.c.h.b16 %v959
        %v1063 = vunpack.c.l.b16 %v960
        %v1064 = vunpack.c.h.b16 %v960
        %v1065 = vunpack.c.l.b16 %v961
        %v1066 = vunpack.c.h.b16 %v961
        %v1067 = vunpack.c.l.b16 %v962
        %v1068 = vunpack.c.h.b16 %v962
        %v1069 = vunpack.c.l.b16 %v963
        %v1070 = vunpack.c.h.b16 %v963
        %v1071 = vunpack.c.l.b16 %v964
        %v1072 = vunpack.c.h.b16 %v964
        %v1073 = vpack.c.b16 %v1011, %v1009
        %v1074 = vpack.c.b16 %v1012, %v1010
        %v1075 = vpack.c.b16 %v1015, %v1013
        %v1076 = vpack.c.b16 %v1016, %v1014
        %v1077 = vpack.c.b16 %v1019, %v1017
        %v1078 = vpack.c.b16 %v1020, %v1018
        %v1079 = vpack.c.b16 %v1023, %v1021
        %v1080 = vpack.c.b16 %v1024, %v1022
        %v1081 = vpack.c.b16 %v1027, %v1025
        %v1082 = vpack.c.b16 %v1028, %v1026
        %v1083 = vpack.c.b16 %v1031, %v1029
        %v1084 = vpack.c.b16 %v1032, %v1030
        %v1085 = vpack.c.b16 %v1035, %v1033
        %v1086 = vpack.c.b16 %v1036, %v1034
        %v1087 = vpack.c.b16 %v1039, %v1037
        %v1088 = vpack.c.b16 %v1040, %v1038
        %v1089 = vpack.c.b16 %v1043, %v1041
        %v1090 = vpack.c.b16 %v1044, %v1042
        %v1091 = vpack.c.b16 %v1047, %v1045
        %v1092 = vpack.c.b16 %v1048, %v1046
        %v1093 = vpack.c.b16 %v1051, %v1049
        %v1094 = vpack.c.b16 %v1052, %v1050
        %v1095 = vpack.c.b16 %v1055, %v1053
        %v1096 = vpack.c.b16 %v1056, %v1054
        %v1097 = vpack.c.b16 %v1059, %v1057
        %v1098 = vpack.c.b16 %v1060, %v1058
        %v1099 = vpack.c.b16 %v1063, %v1061
        %v1100 = vpack.c.b16 %v1064, %v1062
        %v1101 = vpack.c.b16 %v1067, %v1065
        %v1102 = vpack.c.b16 %v1068, %v1066
        %v1103 = vpack.c.b16 %v1071, %v1069
        %v1104 = vpack.c.b16 %v1072, %v1070
        %1137 = vmatprep.subr.bf16.mxu0 %v1088
        %1138 = vmatpush1.bf16.msra.mxu0 %v1087
        %1139 = vmatprep.subr.bf16.mxu0 %v1086
        %1140 = vmatpush1.bf16.msra.mxu0 %v1085
        %1141 = vmatprep.subr.bf16.mxu0 %v1084
        %1142 = vmatpush1.bf16.msra.mxu0 %v1083
        %1143 = vmatprep.subr.bf16.mxu0 %v1082
        %1144 = vmatpush1.bf16.msra.mxu0 %v1081
        %1145 = vmatprep.subr.bf16.mxu0 %v1080
        %1146 = vmatpush1.bf16.msra.mxu0 %v1079
        %1147 = vmatprep.subr.bf16.mxu0 %v1078
        %1148 = vmatpush1.bf16.msra.mxu0 %v1077
        %1149 = vmatprep.subr.bf16.mxu0 %v1076
        %1150 = vmatpush1.bf16.msra.mxu0 %v1075
        %1151 = vmatprep.subr.bf16.mxu0 %v1074
        %1152 = vmatpush1.bf16.msra.mxu0 %v1073
        %1153 = vmatprep.subr.bf16.mxu0 %v1104
        %1154 = vmatpush2.bf16.msra.mxu0 %v1103
        %1155 = vmatprep.subr.bf16.mxu0 %v1102
        %1156 = vmatpush2.bf16.msra.mxu0 %v1101
        %1157 = vmatprep.subr.bf16.mxu0 %v1100
        %1158 = vmatpush2.bf16.msra.mxu0 %v1099
        %1159 = vmatprep.subr.bf16.mxu0 %v1098
        %1160 = vmatpush2.bf16.msra.mxu0 %v1097
        %1161 = vmatprep.subr.bf16.mxu0 %v1096
        %1162 = vmatpush2.bf16.msra.mxu0 %v1095
        %1163 = vmatprep.subr.bf16.mxu0 %v1094
        %1164 = vmatpush2.bf16.msra.mxu0 %v1093
        %1165 = vmatprep.subr.bf16.mxu0 %v1092
        %1166 = vmatpush2.bf16.msra.mxu0 %v1091
        %1167 = vmatprep.subr.bf16.mxu0 %v1090
        %1168 = vmatpush2.bf16.msra.mxu0 %v1089
        %1169 = vmatprep.mubr.bf16.mxu0 %v918
        %1170 = vmatmul.mubr.bf16.gmra.mxu0 %v917
        %v1171 = vpop.f32.mrf.mxu0
        %v1172 = vadd.f32 %v970, %v1171
        %v1173 = vpop.f32.mrf.mxu0
        %v1174 = vadd.f32 %v974, %v1173
        %v1175 = vpop.f32.mrf.mxu0
        %v1176 = vadd.f32 %v970, %v1175
        %v1177 = vpop.f32.mrf.mxu0
        %v1178 = vadd.f32 %v974, %v1177
        %1179 = vmatprep.mubr.bf16.mxu0 %v920
        %1180 = vmatmul.mubr.bf16.gmra.mxu0 %v919
        %v1181 = vpop.f32.mrf.mxu0
        %v1182 = vadd.f32 %v970, %v1181
        %v1183 = vpop.f32.mrf.mxu0
        %v1184 = vadd.f32 %v974, %v1183
        %v1185 = vpop.f32.mrf.mxu0
        %v1186 = vadd.f32 %v970, %v1185
        %v1187 = vpop.f32.mrf.mxu0
        %v1188 = vadd.f32 %v974, %v1187
        %1189 = vmatprep.mubr.bf16.mxu0 %v922
        %1190 = vmatmul.mubr.bf16.gmra.mxu0 %v921
        %v1191 = vpop.f32.mrf.mxu0
        %v1192 = vadd.f32 %v970, %v1191
        %v1193 = vpop.f32.mrf.mxu0
        %v1194 = vadd.f32 %v974, %v1193
        %v1195 = vpop.f32.mrf.mxu0
        %v1196 = vadd.f32 %v970, %v1195
        %v1197 = vpop.f32.mrf.mxu0
        %v1198 = vadd.f32 %v974, %v1197
        %1199 = vmatprep.mubr.bf16.mxu0 %v924
        %1200 = vmatmul.mubr.bf16.gmra.mxu0 %v923
        %v1201 = vpop.f32.mrf.mxu0
        %v1202 = vadd.f32 %v970, %v1201
        %v1203 = vpop.f32.mrf.mxu0
        %v1204 = vadd.f32 %v974, %v1203
        %v1205 = vpop.f32.mrf.mxu0
        %v1206 = vadd.f32 %v970, %v1205
        %v1207 = vpop.f32.mrf.mxu0
        %v1208 = vadd.f32 %v974, %v1207
        %1209 = vmatprep.mubr.bf16.mxu0 %v926
        %1210 = vmatmul.mubr.bf16.gmra.mxu0 %v925
        %v1211 = vpop.f32.mrf.mxu0
        %v1212 = vadd.f32 %v970, %v1211
        %v1213 = vpop.f32.mrf.mxu0
        %v1214 = vadd.f32 %v974, %v1213
        %v1215 = vpop.f32.mrf.mxu0
        %v1216 = vadd.f32 %v970, %v1215
        %v1217 = vpop.f32.mrf.mxu0
        %v1218 = vadd.f32 %v974, %v1217
        %1219 = vmatprep.mubr.bf16.mxu0 %v928
        %1220 = vmatmul.mubr.bf16.gmra.mxu0 %v927
        %v1221 = vpop.f32.mrf.mxu0
        %v1222 = vadd.f32 %v970, %v1221
        %v1223 = vpop.f32.mrf.mxu0
        %v1224 = vadd.f32 %v974, %v1223
        %v1225 = vpop.f32.mrf.mxu0
        %v1226 = vadd.f32 %v970, %v1225
        %v1227 = vpop.f32.mrf.mxu0
        %v1228 = vadd.f32 %v974, %v1227
        %1229 = vmatprep.mubr.bf16.mxu0 %v930
        %1230 = vmatmul.mubr.bf16.gmra.mxu0 %v929
        %v1231 = vpop.f32.mrf.mxu0
        %v1232 = vadd.f32 %v970, %v1231
        %v1233 = vpop.f32.mrf.mxu0
        %v1234 = vadd.f32 %v974, %v1233
        %v1235 = vpop.f32.mrf.mxu0
        %v1236 = vadd.f32 %v970, %v1235
        %v1237 = vpop.f32.mrf.mxu0
        %v1238 = vadd.f32 %v974, %v1237
        %1239 = vmatprep.mubr.bf16.mxu0 %v932
        %1240 = vmatmul.mubr.bf16.gmra.mxu0 %v931
        %v1241 = vpop.f32.mrf.mxu0
        %v1242 = vadd.f32 %v970, %v1241
        %v1243 = vpop.f32.mrf.mxu0
        %v1244 = vadd.f32 %v974, %v1243
        %v1245 = vpop.f32.mrf.mxu0
        %v1246 = vadd.f32 %v970, %v1245
        %v1247 = vpop.f32.mrf.mxu0
        %v1248 = vadd.f32 %v974, %v1247
        %1249 = vdwg.mxu0
        %v1250 = vmax.f32 %v1172, 0.0
        %v1251 = vmax.f32 %v1174, 0.0
        %v1252 = vmax.f32 %v1176, 0.0
        %v1253 = vmax.f32 %v1178, 0.0
        %v1254 = vmax.f32 %v1182, 0.0
        %v1255 = vmax.f32 %v1184, 0.0
        %v1256 = vmax.f32 %v1186, 0.0
        %v1257 = vmax.f32 %v1188, 0.0
        %v1258 = vmax.f32 %v1192, 0.0
        %v1259 = vmax.f32 %v1194, 0.0
        %v1260 = vmax.f32 %v1196, 0.0
        %v1261 = vmax.f32 %v1198, 0.0
        %v1262 = vmax.f32 %v1202, 0.0
        %v1263 = vmax.f32 %v1204, 0.0
        %v1264 = vmax.f32 %v1206, 0.0
        %v1265 = vmax.f32 %v1208, 0.0
        %v1266 = vmax.f32 %v1212, 0.0
        %v1267 = vmax.f32 %v1214, 0.0
        %v1268 = vmax.f32 %v1216, 0.0
        %v1269 = vmax.f32 %v1218, 0.0
        %v1270 = vmax.f32 %v1222, 0.0
        %v1271 = vmax.f32 %v1224, 0.0
        %v1272 = vmax.f32 %v1226, 0.0
        %v1273 = vmax.f32 %v1228, 0.0
        %v1274 = vmax.f32 %v1232, 0.0
        %v1275 = vmax.f32 %v1234, 0.0
        %v1276 = vmax.f32 %v1236, 0.0
        %v1277 = vmax.f32 %v1238, 0.0
        %v1278 = vmax.f32 %v1242, 0.0
        %v1279 = vmax.f32 %v1244, 0.0
        %v1280 = vmax.f32 %v1246, 0.0
        %v1281 = vmax.f32 %v1248, 0.0
        %v1282 = vpack.c.bf16 %v1252, %v1250
        %v1283 = vpack.c.bf16 %v1253, %v1251
        %v1284 = vpack.c.bf16 %v1256, %v1254
        %v1285 = vpack.c.bf16 %v1257, %v1255
        %v1286 = vpack.c.bf16 %v1260, %v1258
        %v1287 = vpack.c.bf16 %v1261, %v1259
        %v1288 = vpack.c.bf16 %v1264, %v1262
        %v1289 = vpack.c.bf16 %v1265, %v1263
        %v1290 = vpack.c.bf16 %v1268, %v1266
        %v1291 = vpack.c.bf16 %v1269, %v1267
        %v1292 = vpack.c.bf16 %v1272, %v1270
        %v1293 = vpack.c.bf16 %v1273, %v1271
        %v1294 = vpack.c.bf16 %v1276, %v1274
        %v1295 = vpack.c.bf16 %v1277, %v1275
        %v1296 = vpack.c.bf16 %v1280, %v1278
        %v1297 = vpack.c.bf16 %v1281, %v1279
        %v1298 = vld [vmem:[%s7] sm:$0xff]
        %v1299 = vld [vmem:[%s7 + $0x8] sm:$0xff]
        %v1300 = vld [vmem:[%s7 + $0x10] sm:$0xff]
        %v1301 = vld [vmem:[%s7 + $0x18] sm:$0xff]
        %v1302 = vld [vmem:[%s7 + $0x20] sm:$0xff]
        %v1303 = vld [vmem:[%s7 + $0x28] sm:$0xff]
        %v1304 = vld [vmem:[%s7 + $0x30] sm:$0xff]
        %v1305 = vld [vmem:[%s7 + $0x38] sm:$0xff]
        %v1306 = vld [vmem:[%s7 + $0x40] sm:$0xff]
        %v1307 = vld [vmem:[%s7 + $0x48] sm:$0xff]
        %v1308 = vld [vmem:[%s7 + $0x50] sm:$0xff]
        %v1309 = vld [vmem:[%s7 + $0x58] sm:$0xff]
        %v1310 = vld [vmem:[%s7 + $0x60] sm:$0xff]
        %v1311 = vld [vmem:[%s7 + $0x68] sm:$0xff]
        %v1312 = vld [vmem:[%s7 + $0x70] sm:$0xff]
        %v1313 = vld [vmem:[%s7 + $0x78] sm:$0xff]
        %v1314 = vld [vmem:[%s7 + $0x80] sm:$0xff]
        %v1315 = vld [vmem:[%s7 + $0x88] sm:$0xff]
        %v1316 = vld [vmem:[%s7 + $0x90] sm:$0xff]
        %v1317 = vld [vmem:[%s7 + $0x98] sm:$0xff]
        %v1318 = vld [vmem:[%s7 + $0xa0] sm:$0xff]
        %v1319 = vld [vmem:[%s7 + $0xa8] sm:$0xff]
        %v1320 = vld [vmem:[%s7 + $0xb0] sm:$0xff]
        %v1321 = vld [vmem:[%s7 + $0xb8] sm:$0xff]
        %v1322 = vld [vmem:[%s7 + $0xc0] sm:$0xff]
        %v1323 = vld [vmem:[%s7 + $0xc8] sm:$0xff]
        %v1324 = vld [vmem:[%s7 + $0xd0] sm:$0xff]
        %v1325 = vld [vmem:[%s7 + $0xd8] sm:$0xff]
        %v1326 = vld [vmem:[%s7 + $0xe0] sm:$0xff]
        %v1327 = vld [vmem:[%s7 + $0xe8] sm:$0xff]
        %v1328 = vld [vmem:[%s7 + $0xf0] sm:$0xff]
        %v1329 = vld [vmem:[%s7 + $0xf8] sm:$0xff]
        %v1330 = vld [vmem:[%s8] sm:$0x3]
        %v1332 = vlaneseq
        %v1333 = vshrl.u32 %v1332, 7
        %v1334 = vsub.s32 0, %v1333
        %v1335 = vrot.slane %v1330, %v1334
        %v1336 = vlaneseq
        %v1337 = vshrl.u32 %v1336, 7
        %v1338 = vsub.s32 1, %v1337
        %v1339 = vrot.slane %v1330, %v1338
        %v1374 = vunpack.c.l.b16 %v1298
        %v1375 = vunpack.c.h.b16 %v1298
        %v1376 = vunpack.c.l.b16 %v1299
        %v1377 = vunpack.c.h.b16 %v1299
        %v1378 = vunpack.c.l.b16 %v1300
        %v1379 = vunpack.c.h.b16 %v1300
        %v1380 = vunpack.c.l.b16 %v1301
        %v1381 = vunpack.c.h.b16 %v1301
        %v1382 = vunpack.c.l.b16 %v1302
        %v1383 = vunpack.c.h.b16 %v1302
        %v1384 = vunpack.c.l.b16 %v1303
        %v1385 = vunpack.c.h.b16 %v1303
        %v1386 = vunpack.c.l.b16 %v1304
        %v1387 = vunpack.c.h.b16 %v1304
        %v1388 = vunpack.c.l.b16 %v1305
        %v1389 = vunpack.c.h.b16 %v1305
        %v1390 = vunpack.c.l.b16 %v1306
        %v1391 = vunpack.c.h.b16 %v1306
        %v1392 = vunpack.c.l.b16 %v1307
        %v1393 = vunpack.c.h.b16 %v1307
        %v1394 = vunpack.c.l.b16 %v1308
        %v1395 = vunpack.c.h.b16 %v1308
        %v1396 = vunpack.c.l.b16 %v1309
        %v1397 = vunpack.c.h.b16 %v1309
        %v1398 = vunpack.c.l.b16 %v1310
        %v1399 = vunpack.c.h.b16 %v1310
        %v1400 = vunpack.c.l.b16 %v1311
        %v1401 = vunpack.c.h.b16 %v1311
        %v1402 = vunpack.c.l.b16 %v1312
        %v1403 = vunpack.c.h.b16 %v1312
        %v1404 = vunpack.c.l.b16 %v1313
        %v1405 = vunpack.c.h.b16 %v1313
        %v1406 = vunpack.c.l.b16 %v1314
        %v1407 = vunpack.c.h.b16 %v1314
        %v1408 = vunpack.c.l.b16 %v1315
        %v1409 = vunpack.c.h.b16 %v1315
        %v1410 = vunpack.c.l.b16 %v1316
        %v1411 = vunpack.c.h.b16 %v1316
        %v1412 = vunpack.c.l.b16 %v1317
        %v1413 = vunpack.c.h.b16 %v1317
        %v1414 = vunpack.c.l.b16 %v1318
        %v1415 = vunpack.c.h.b16 %v1318
        %v1416 = vunpack.c.l.b16 %v1319
        %v1417 = vunpack.c.h.b16 %v1319
        %v1418 = vunpack.c.l.b16 %v1320
        %v1419 = vunpack.c.h.b16 %v1320
        %v1420 = vunpack.c.l.b16 %v1321
        %v1421 = vunpack.c.h.b16 %v1321
        %v1422 = vunpack.c.l.b16 %v1322
        %v1423 = vunpack.c.h.b16 %v1322
        %v1424 = vunpack.c.l.b16 %v1323
        %v1425 = vunpack.c.h.b16 %v1323
        %v1426 = vunpack.c.l.b16 %v1324
        %v1427 = vunpack.c.h.b16 %v1324
        %v1428 = vunpack.c.l.b16 %v1325
        %v1429 = vunpack.c.h.b16 %v1325
        %v1430 = vunpack.c.l.b16 %v1326
        %v1431 = vunpack.c.h.b16 %v1326
        %v1432 = vunpack.c.l.b16 %v1327
        %v1433 = vunpack.c.h.b16 %v1327
        %v1434 = vunpack.c.l.b16 %v1328
        %v1435 = vunpack.c.h.b16 %v1328
        %v1436 = vunpack.c.l.b16 %v1329
        %v1437 = vunpack.c.h.b16 %v1329
        %v1438 = vpack.c.b16 %v1376, %v1374
        %v1439 = vpack.c.b16 %v1377, %v1375
        %v1440 = vpack.c.b16 %v1380, %v1378
        %v1441 = vpack.c.b16 %v1381, %v1379
        %v1442 = vpack.c.b16 %v1384, %v1382
        %v1443 = vpack.c.b16 %v1385, %v1383
        %v1444 = vpack.c.b16 %v1388, %v1386
        %v1445 = vpack.c.b16 %v1389, %v1387
        %v1446 = vpack.c.b16 %v1392, %v1390
        %v1447 = vpack.c.b16 %v1393, %v1391
        %v1448 = vpack.c.b16 %v1396, %v1394
        %v1449 = vpack.c.b16 %v1397, %v1395
        %v1450 = vpack.c.b16 %v1400, %v1398
        %v1451 = vpack.c.b16 %v1401, %v1399
        %v1452 = vpack.c.b16 %v1404, %v1402
        %v1453 = vpack.c.b16 %v1405, %v1403
        %v1454 = vpack.c.b16 %v1408, %v1406
        %v1455 = vpack.c.b16 %v1409, %v1407
        %v1456 = vpack.c.b16 %v1412, %v1410
        %v1457 = vpack.c.b16 %v1413, %v1411
        %v1458 = vpack.c.b16 %v1416, %v1414
        %v1459 = vpack.c.b16 %v1417, %v1415
        %v1460 = vpack.c.b16 %v1420, %v1418
        %v1461 = vpack.c.b16 %v1421, %v1419
        %v1462 = vpack.c.b16 %v1424, %v1422
        %v1463 = vpack.c.b16 %v1425, %v1423
        %v1464 = vpack.c.b16 %v1428, %v1426
        %v1465 = vpack.c.b16 %v1429, %v1427
        %v1466 = vpack.c.b16 %v1432, %v1430
        %v1467 = vpack.c.b16 %v1433, %v1431
        %v1468 = vpack.c.b16 %v1436, %v1434
        %v1469 = vpack.c.b16 %v1437, %v1435
        %1502 = vmatprep.subr.bf16.mxu0 %v1453
        %1503 = vmatpush1.bf16.msra.mxu0 %v1452
        %1504 = vmatprep.subr.bf16.mxu0 %v1451
        %1505 = vmatpush1.bf16.msra.mxu0 %v1450
        %1506 = vmatprep.subr.bf16.mxu0 %v1449
        %1507 = vmatpush1.bf16.msra.mxu0 %v1448
        %1508 = vmatprep.subr.bf16.mxu0 %v1447
        %1509 = vmatpush1.bf16.msra.mxu0 %v1446
        %1510 = vmatprep.subr.bf16.mxu0 %v1445
        %1511 = vmatpush1.bf16.msra.mxu0 %v1444
        %1512 = vmatprep.subr.bf16.mxu0 %v1443
        %1513 = vmatpush1.bf16.msra.mxu0 %v1442
        %1514 = vmatprep.subr.bf16.mxu0 %v1441
        %1515 = vmatpush1.bf16.msra.mxu0 %v1440
        %1516 = vmatprep.subr.bf16.mxu0 %v1439
        %1517 = vmatpush1.bf16.msra.mxu0 %v1438
        %1518 = vmatprep.subr.bf16.mxu0 %v1469
        %1519 = vmatpush2.bf16.msra.mxu0 %v1468
        %1520 = vmatprep.subr.bf16.mxu0 %v1467
        %1521 = vmatpush2.bf16.msra.mxu0 %v1466
        %1522 = vmatprep.subr.bf16.mxu0 %v1465
        %1523 = vmatpush2.bf16.msra.mxu0 %v1464
        %1524 = vmatprep.subr.bf16.mxu0 %v1463
        %1525 = vmatpush2.bf16.msra.mxu0 %v1462
        %1526 = vmatprep.subr.bf16.mxu0 %v1461
        %1527 = vmatpush2.bf16.msra.mxu0 %v1460
        %1528 = vmatprep.subr.bf16.mxu0 %v1459
        %1529 = vmatpush2.bf16.msra.mxu0 %v1458
        %1530 = vmatprep.subr.bf16.mxu0 %v1457
        %1531 = vmatpush2.bf16.msra.mxu0 %v1456
        %1532 = vmatprep.subr.bf16.mxu0 %v1455
        %1533 = vmatpush2.bf16.msra.mxu0 %v1454
        %1534 = vmatprep.mubr.bf16.mxu0 %v1283
        %1535 = vmatmul.mubr.bf16.gmra.mxu0 %v1282
        %v1536 = vpop.f32.mrf.mxu0
        %v1537 = vadd.f32 %v1335, %v1536
        %v1538 = vpop.f32.mrf.mxu0
        %v1539 = vadd.f32 %v1339, %v1538
        %v1540 = vpop.f32.mrf.mxu0
        %v1541 = vadd.f32 %v1335, %v1540
        %v1542 = vpop.f32.mrf.mxu0
        %v1543 = vadd.f32 %v1339, %v1542
        %1544 = vmatprep.mubr.bf16.mxu0 %v1285
        %1545 = vmatmul.mubr.bf16.gmra.mxu0 %v1284
        %v1546 = vpop.f32.mrf.mxu0
        %v1547 = vadd.f32 %v1335, %v1546
        %v1548 = vpop.f32.mrf.mxu0
        %v1549 = vadd.f32 %v1339, %v1548
        %v1550 = vpop.f32.mrf.mxu0
        %v1551 = vadd.f32 %v1335, %v1550
        %v1552 = vpop.f32.mrf.mxu0
        %v1553 = vadd.f32 %v1339, %v1552
        %1554 = vmatprep.mubr.bf16.mxu0 %v1287
        %1555 = vmatmul.mubr.bf16.gmra.mxu0 %v1286
        %v1556 = vpop.f32.mrf.mxu0
        %v1557 = vadd.f32 %v1335, %v1556
        %v1558 = vpop.f32.mrf.mxu0
        %v1559 = vadd.f32 %v1339, %v1558
        %v1560 = vpop.f32.mrf.mxu0
        %v1561 = vadd.f32 %v1335, %v1560
        %v1562 = vpop.f32.mrf.mxu0
        %v1563 = vadd.f32 %v1339, %v1562
        %1564 = vmatprep.mubr.bf16.mxu0 %v1289
        %1565 = vmatmul.mubr.bf16.gmra.mxu0 %v1288
        %v1566 = vpop.f32.mrf.mxu0
        %v1567 = vadd.f32 %v1335, %v1566
        %v1568 = vpop.f32.mrf.mxu0
        %v1569 = vadd.f32 %v1339, %v1568
        %v1570 = vpop.f32.mrf.mxu0
        %v1571 = vadd.f32 %v1335, %v1570
        %v1572 = vpop.f32.mrf.mxu0
        %v1573 = vadd.f32 %v1339, %v1572
        %1574 = vmatprep.mubr.bf16.mxu0 %v1291
        %1575 = vmatmul.mubr.bf16.gmra.mxu0 %v1290
        %v1576 = vpop.f32.mrf.mxu0
        %v1577 = vadd.f32 %v1335, %v1576
        %v1578 = vpop.f32.mrf.mxu0
        %v1579 = vadd.f32 %v1339, %v1578
        %v1580 = vpop.f32.mrf.mxu0
        %v1581 = vadd.f32 %v1335, %v1580
        %v1582 = vpop.f32.mrf.mxu0
        %v1583 = vadd.f32 %v1339, %v1582
        %1584 = vmatprep.mubr.bf16.mxu0 %v1293
        %1585 = vmatmul.mubr.bf16.gmra.mxu0 %v1292
        %v1586 = vpop.f32.mrf.mxu0
        %v1587 = vadd.f32 %v1335, %v1586
        %v1588 = vpop.f32.mrf.mxu0
        %v1589 = vadd.f32 %v1339, %v1588
        %v1590 = vpop.f32.mrf.mxu0
        %v1591 = vadd.f32 %v1335, %v1590
        %v1592 = vpop.f32.mrf.mxu0
        %v1593 = vadd.f32 %v1339, %v1592
        %1594 = vmatprep.mubr.bf16.mxu0 %v1295
        %1595 = vmatmul.mubr.bf16.gmra.mxu0 %v1294
        %v1596 = vpop.f32.mrf.mxu0
        %v1597 = vadd.f32 %v1335, %v1596
        %v1598 = vpop.f32.mrf.mxu0
        %v1599 = vadd.f32 %v1339, %v1598
        %v1600 = vpop.f32.mrf.mxu0
        %v1601 = vadd.f32 %v1335, %v1600
        %v1602 = vpop.f32.mrf.mxu0
        %v1603 = vadd.f32 %v1339, %v1602
        %1604 = vmatprep.mubr.bf16.mxu0 %v1297
        %1605 = vmatmul.mubr.bf16.gmra.mxu0 %v1296
        %v1606 = vpop.f32.mrf.mxu0
        %v1607 = vadd.f32 %v1335, %v1606
        %v1608 = vpop.f32.mrf.mxu0
        %v1609 = vadd.f32 %v1339, %v1608
        %v1610 = vpop.f32.mrf.mxu0
        %v1611 = vadd.f32 %v1335, %v1610
        %v1612 = vpop.f32.mrf.mxu0
        %v1613 = vadd.f32 %v1339, %v1612
        %1614 = vdwg.mxu0
        %v1615 = vmax.f32 %v1537, 0.0
        %v1616 = vmax.f32 %v1539, 0.0
        %v1617 = vmax.f32 %v1541, 0.0
        %v1618 = vmax.f32 %v1543, 0.0
        %v1619 = vmax.f32 %v1547, 0.0
        %v1620 = vmax.f32 %v1549, 0.0
        %v1621 = vmax.f32 %v1551, 0.0
        %v1622 = vmax.f32 %v1553, 0.0
        %v1623 = vmax.f32 %v1557, 0.0
        %v1624 = vmax.f32 %v1559, 0.0
        %v1625 = vmax.f32 %v1561, 0.0
        %v1626 = vmax.f32 %v1563, 0.0
        %v1627 = vmax.f32 %v1567, 0.0
        %v1628 = vmax.f32 %v1569, 0.0
        %v1629 = vmax.f32 %v1571, 0.0
        %v1630 = vmax.f32 %v1573, 0.0
        %v1631 = vmax.f32 %v1577, 0.0
        %v1632 = vmax.f32 %v1579, 0.0
        %v1633 = vmax.f32 %v1581, 0.0
        %v1634 = vmax.f32 %v1583, 0.0
        %v1635 = vmax.f32 %v1587, 0.0
        %v1636 = vmax.f32 %v1589, 0.0
        %v1637 = vmax.f32 %v1591, 0.0
        %v1638 = vmax.f32 %v1593, 0.0
        %v1639 = vmax.f32 %v1597, 0.0
        %v1640 = vmax.f32 %v1599, 0.0
        %v1641 = vmax.f32 %v1601, 0.0
        %v1642 = vmax.f32 %v1603, 0.0
        %v1643 = vmax.f32 %v1607, 0.0
        %v1644 = vmax.f32 %v1609, 0.0
        %v1645 = vmax.f32 %v1611, 0.0
        %v1646 = vmax.f32 %v1613, 0.0
        %v1647 = vpack.c.bf16 %v1617, %v1615
        %v1648 = vpack.c.bf16 %v1618, %v1616
        %v1649 = vpack.c.bf16 %v1621, %v1619
        %v1650 = vpack.c.bf16 %v1622, %v1620
        %v1651 = vpack.c.bf16 %v1625, %v1623
        %v1652 = vpack.c.bf16 %v1626, %v1624
        %v1653 = vpack.c.bf16 %v1629, %v1627
        %v1654 = vpack.c.bf16 %v1630, %v1628
        %v1655 = vpack.c.bf16 %v1633, %v1631
        %v1656 = vpack.c.bf16 %v1634, %v1632
        %v1657 = vpack.c.bf16 %v1637, %v1635
        %v1658 = vpack.c.bf16 %v1638, %v1636
        %v1659 = vpack.c.bf16 %v1641, %v1639
        %v1660 = vpack.c.bf16 %v1642, %v1640
        %v1661 = vpack.c.bf16 %v1645, %v1643
        %v1662 = vpack.c.bf16 %v1646, %v1644
        %v1663 = vld [vmem:[#allocation2] sm:$0xf]
        %v1664 = vld [vmem:[#allocation2 + $0x4] sm:$0xf]
        %v1665 = vld [vmem:[#allocation2 + $0x8] sm:$0xf]
        %v1666 = vld [vmem:[#allocation2 + $0xc] sm:$0xf]
        %v1667 = vld [vmem:[#allocation2 + $0x10] sm:$0xf]
        %v1668 = vld [vmem:[#allocation2 + $0x14] sm:$0xf]
        %v1669 = vld [vmem:[#allocation2 + $0x18] sm:$0xf]
        %v1670 = vld [vmem:[#allocation2 + $0x1c] sm:$0xf]
        %v1671 = vld [vmem:[#allocation2 + $0x20] sm:$0xf]
        %v1672 = vld [vmem:[#allocation2 + $0x24] sm:$0xf]
        %v1673 = vld [vmem:[#allocation2 + $0x28] sm:$0xf]
        %v1674 = vld [vmem:[#allocation2 + $0x2c] sm:$0xf]
        %v1675 = vld [vmem:[#allocation2 + $0x30] sm:$0xf]
        %v1676 = vld [vmem:[#allocation2 + $0x34] sm:$0xf]
        %v1677 = vld [vmem:[#allocation2 + $0x38] sm:$0xf]
        %v1678 = vld [vmem:[#allocation2 + $0x3c] sm:$0xf]
        %v1679 = vld [vmem:[#allocation2 + $0x40] sm:$0xf]
        %v1680 = vld [vmem:[#allocation2 + $0x44] sm:$0xf]
        %v1681 = vld [vmem:[#allocation2 + $0x48] sm:$0xf]
        %v1682 = vld [vmem:[#allocation2 + $0x4c] sm:$0xf]
        %v1683 = vld [vmem:[#allocation2 + $0x50] sm:$0xf]
        %v1684 = vld [vmem:[#allocation2 + $0x54] sm:$0xf]
        %v1685 = vld [vmem:[#allocation2 + $0x58] sm:$0xf]
        %v1686 = vld [vmem:[#allocation2 + $0x5c] sm:$0xf]
        %v1687 = vld [vmem:[#allocation2 + $0x60] sm:$0xf]
        %v1688 = vld [vmem:[#allocation2 + $0x64] sm:$0xf]
        %v1689 = vld [vmem:[#allocation2 + $0x68] sm:$0xf]
        %v1690 = vld [vmem:[#allocation2 + $0x6c] sm:$0xf]
        %v1691 = vld [vmem:[#allocation2 + $0x70] sm:$0xf]
        %v1692 = vld [vmem:[#allocation2 + $0x74] sm:$0xf]
        %v1693 = vld [vmem:[#allocation2 + $0x78] sm:$0xf]
        %v1694 = vld [vmem:[#allocation2 + $0x7c] sm:$0xf]
        %v1695 = vld [vmem:[%s10] sm:$0x1]
        %v1697 = vlaneseq
        %v1698 = vshrl.u32 %v1697, 7
        %v1699 = vsub.s32 0, %v1698
        %v1700 = vrot.slane %v1695, %v1699
        %v1734 = vunpack.c.l.b16 %v1663
        %v1735 = vunpack.c.l.b16 %v1664
        %v1736 = vunpack.c.l.b16 %v1665
        %v1737 = vunpack.c.l.b16 %v1666
        %v1738 = vunpack.c.l.b16 %v1667
        %v1739 = vunpack.c.l.b16 %v1668
        %v1740 = vunpack.c.l.b16 %v1669
        %v1741 = vunpack.c.l.b16 %v1670
        %v1742 = vunpack.c.l.b16 %v1671
        %v1743 = vunpack.c.l.b16 %v1672
        %v1744 = vunpack.c.l.b16 %v1673
        %v1745 = vunpack.c.l.b16 %v1674
        %v1746 = vunpack.c.l.b16 %v1675
        %v1747 = vunpack.c.l.b16 %v1676
        %v1748 = vunpack.c.l.b16 %v1677
        %v1749 = vunpack.c.l.b16 %v1678
        %v1750 = vunpack.c.l.b16 %v1679
        %v1751 = vunpack.c.l.b16 %v1680
        %v1752 = vunpack.c.l.b16 %v1681
        %v1753 = vunpack.c.l.b16 %v1682
        %v1754 = vunpack.c.l.b16 %v1683
        %v1755 = vunpack.c.l.b16 %v1684
        %v1756 = vunpack.c.l.b16 %v1685
        %v1757 = vunpack.c.l.b16 %v1686
        %v1758 = vunpack.c.l.b16 %v1687
        %v1759 = vunpack.c.l.b16 %v1688
        %v1760 = vunpack.c.l.b16 %v1689
        %v1761 = vunpack.c.l.b16 %v1690
        %v1762 = vunpack.c.l.b16 %v1691
        %v1763 = vunpack.c.l.b16 %v1692
        %v1764 = vunpack.c.l.b16 %v1693
        %v1765 = vunpack.c.l.b16 %v1694
        %v1766 = vpack.c.b16 %v1735, %v1734
        %v1767 = vpack.c.b16 %v1737, %v1736
        %v1768 = vpack.c.b16 %v1739, %v1738
        %v1769 = vpack.c.b16 %v1741, %v1740
        %v1770 = vpack.c.b16 %v1743, %v1742
        %v1771 = vpack.c.b16 %v1745, %v1744
        %v1772 = vpack.c.b16 %v1747, %v1746
        %v1773 = vpack.c.b16 %v1749, %v1748
        %v1774 = vpack.c.b16 %v1751, %v1750
        %v1775 = vpack.c.b16 %v1753, %v1752
        %v1776 = vpack.c.b16 %v1755, %v1754
        %v1777 = vpack.c.b16 %v1757, %v1756
        %v1778 = vpack.c.b16 %v1759, %v1758
        %v1779 = vpack.c.b16 %v1761, %v1760
        %v1780 = vpack.c.b16 %v1763, %v1762
        %v1781 = vpack.c.b16 %v1765, %v1764
        %1798 = vmatprep.subr.bf16.mxu0 0
        %1799 = vmatpush1.bf16.msra.mxu0 %v1773
        %1800 = vmatprep.subr.bf16.mxu0 0
        %1801 = vmatpush1.bf16.msra.mxu0 %v1772
        %1802 = vmatprep.subr.bf16.mxu0 0
        %1803 = vmatpush1.bf16.msra.mxu0 %v1771
        %1804 = vmatprep.subr.bf16.mxu0 0
        %1805 = vmatpush1.bf16.msra.mxu0 %v1770
        %1806 = vmatprep.subr.bf16.mxu0 0
        %1807 = vmatpush1.bf16.msra.mxu0 %v1769
        %1808 = vmatprep.subr.bf16.mxu0 0
        %1809 = vmatpush1.bf16.msra.mxu0 %v1768
        %1810 = vmatprep.subr.bf16.mxu0 0
        %1811 = vmatpush1.bf16.msra.mxu0 %v1767
        %1812 = vmatprep.subr.bf16.mxu0 0
        %1813 = vmatpush1.bf16.msra.mxu0 %v1766
        %1814 = vmatprep.subr.bf16.mxu0 0
        %1815 = vmatpush2.bf16.msra.mxu0 %v1781
        %1816 = vmatprep.subr.bf16.mxu0 0
        %1817 = vmatpush2.bf16.msra.mxu0 %v1780
        %1818 = vmatprep.subr.bf16.mxu0 0
        %1819 = vmatpush2.bf16.msra.mxu0 %v1779
        %1820 = vmatprep.subr.bf16.mxu0 0
        %1821 = vmatpush2.bf16.msra.mxu0 %v1778
        %1822 = vmatprep.subr.bf16.mxu0 0
        %1823 = vmatpush2.bf16.msra.mxu0 %v1777
        %1824 = vmatprep.subr.bf16.mxu0 0
        %1825 = vmatpush2.bf16.msra.mxu0 %v1776
        %1826 = vmatprep.subr.bf16.mxu0 0
        %1827 = vmatpush2.bf16.msra.mxu0 %v1775
        %1828 = vmatprep.subr.bf16.mxu0 0
        %1829 = vmatpush2.bf16.msra.mxu0 %v1774
        %1830 = vmatprep.mubr.bf16.mxu0 %v1648
        %1831 = vmatmul.mubr.bf16.gmra.mxu0 %v1647
        %v1832 = vpop.f32.mrf.mxu0
        %v1833 = vadd.f32 %v1700, %v1832
        %v1834 = vpop.f32.mrf.mxu0
        %v1835 = vpop.f32.mrf.mxu0
        %v1836 = vadd.f32 %v1700, %v1835
        %v1837 = vpop.f32.mrf.mxu0
        %1838 = vmatprep.mubr.bf16.mxu0 %v1650
        %1839 = vmatmul.mubr.bf16.gmra.mxu0 %v1649
        %v1840 = vpop.f32.mrf.mxu0
        %v1841 = vadd.f32 %v1700, %v1840
        %v1842 = vpop.f32.mrf.mxu0
        %v1843 = vpop.f32.mrf.mxu0
        %v1844 = vadd.f32 %v1700, %v1843
        %v1845 = vpop.f32.mrf.mxu0
        %1846 = vmatprep.mubr.bf16.mxu0 %v1652
        %1847 = vmatmul.mubr.bf16.gmra.mxu0 %v1651
        %v1848 = vpop.f32.mrf.mxu0
        %v1849 = vadd.f32 %v1700, %v1848
        %v1850 = vpop.f32.mrf.mxu0
        %v1851 = vpop.f32.mrf.mxu0
        %v1852 = vadd.f32 %v1700, %v1851
        %v1853 = vpop.f32.mrf.mxu0
        %1854 = vmatprep.mubr.bf16.mxu0 %v1654
        %1855 = vmatmul.mubr.bf16.gmra.mxu0 %v1653
        %v1856 = vpop.f32.mrf.mxu0
        %v1857 = vadd.f32 %v1700, %v1856
        %v1858 = vpop.f32.mrf.mxu0
        %v1859 = vpop.f32.mrf.mxu0
        %v1860 = vadd.f32 %v1700, %v1859
        %v1861 = vpop.f32.mrf.mxu0
        %1862 = vmatprep.mubr.bf16.mxu0 %v1656
        %1863 = vmatmul.mubr.bf16.gmra.mxu0 %v1655
        %v1864 = vpop.f32.mrf.mxu0
        %v1865 = vadd.f32 %v1700, %v1864
        %v1866 = vpop.f32.mrf.mxu0
        %v1867 = vpop.f32.mrf.mxu0
        %v1868 = vadd.f32 %v1700, %v1867
        %v1869 = vpop.f32.mrf.mxu0
        %1870 = vmatprep.mubr.bf16.mxu0 %v1658
        %1871 = vmatmul.mubr.bf16.gmra.mxu0 %v1657
        %v1872 = vpop.f32.mrf.mxu0
        %v1873 = vadd.f32 %v1700, %v1872
        %v1874 = vpop.f32.mrf.mxu0
        %v1875 = vpop.f32.mrf.mxu0
        %v1876 = vadd.f32 %v1700, %v1875
        %v1877 = vpop.f32.mrf.mxu0
        %1878 = vmatprep.mubr.bf16.mxu0 %v1660
        %1879 = vmatmul.mubr.bf16.gmra.mxu0 %v1659
        %v1880 = vpop.f32.mrf.mxu0
        %v1881 = vadd.f32 %v1700, %v1880
        %v1882 = vpop.f32.mrf.mxu0
        %v1883 = vpop.f32.mrf.mxu0
        %v1884 = vadd.f32 %v1700, %v1883
        %v1885 = vpop.f32.mrf.mxu0
        %1886 = vmatprep.mubr.bf16.mxu0 %v1662
        %1887 = vmatmul.mubr.bf16.gmra.mxu0 %v1661
        %v1888 = vpop.f32.mrf.mxu0
        %v1889 = vadd.f32 %v1700, %v1888
        %v1890 = vpop.f32.mrf.mxu0
        %v1891 = vpop.f32.mrf.mxu0
        %v1892 = vadd.f32 %v1700, %v1891
        %v1893 = vpop.f32.mrf.mxu0
        %1894 = vdwg.mxu0
        %1895 = vst [vmem:[%s425] sm:$0xff] %v1833
        %1896 = vst [vmem:[%s425 + $0x8] sm:$0xff] %v1836
        %1897 = vst [vmem:[%s425 + $0x10] sm:$0xff] %v1841
        %1898 = vst [vmem:[%s425 + $0x18] sm:$0xff] %v1844
        %1899 = vst [vmem:[%s425 + $0x20] sm:$0xff] %v1849
        %1900 = vst [vmem:[%s425 + $0x28] sm:$0xff] %v1852
        %1901 = vst [vmem:[%s425 + $0x30] sm:$0xff] %v1857
        %1902 = vst [vmem:[%s425 + $0x38] sm:$0xff] %v1860
        %1903 = vst [vmem:[%s425 + $0x40] sm:$0xff] %v1865
        %1904 = vst [vmem:[%s425 + $0x48] sm:$0xff] %v1868
        %1905 = vst [vmem:[%s425 + $0x50] sm:$0xff] %v1873
        %1906 = vst [vmem:[%s425 + $0x58] sm:$0xff] %v1876
        %1907 = vst [vmem:[%s425 + $0x60] sm:$0xff] %v1881
        %1908 = vst [vmem:[%s425 + $0x68] sm:$0xff] %v1884
        %1909 = vst [vmem:[%s425 + $0x70] sm:$0xff] %v1889
        %1910 = vst [vmem:[%s425 + $0x78] sm:$0xff] %v1892
        %s1911 = smul.u32 16, %s23
        %p1912 = scmp.lt.s32.totalorder %s1911, 31
        %s1913 = scalar_select %p1912, %s1911, 31
        %s1914 = smul.addr %s1913, 8
        %s1915 = scalar_lea.vmem %s11, %s1914
        // Predicated region
        $region69: #{diffusion_mlp_v2.1} parent=63 // pred_check
          %p1916 = pneg %p282
        $region70: #{diffusion_mlp_v2.1} parent=63 // pred_check_branch
          %1918 = sbr.rel (%p1916) target = $region72
        $region71: #{diffusion_mlp_v2.1} parent=63 // pred_region
          %s1919 = smul.u32 16, %s23
        $region72: #{diffusion_mlp_v2.1} parent=63 // pred_fallthru
          _
      $region64: #{diffusion_mlp_v2.1} parent=5 // pred_fallthru
        _
      %p1920 = scmp.le.s32.totalorder 2, %s18
      // Predicated region
      $region73: #{diffusion_mlp_v2.1} parent=5 // pred_check
        %p1921 = pneg %p1920
      $region74: #{diffusion_mlp_v2.1} parent=5 // pred_check_branch
        %1923 = sbr.rel (%p1921) target = $region76
      $region75: #{diffusion_mlp_v2.1} parent=5 // pred_region
        %s1924 = ssub.s32 %s18, 2
        // Predicated region
        $region77: #{diffusion_mlp_v2.1} parent=75 // pred_check
          %p1925 = pneg %p288
        $region78: #{diffusion_mlp_v2.1} parent=75 // pred_check_branch
          %1927 = sbr.rel (%p1925) target = $region80
        $region79: #{diffusion_mlp_v2.1} parent=75 // pred_region
          %s1928 = smul.u32 16, %s24
          %p1929 = scmp.lt.s32.totalorder %s1928, 31
          %s1930 = scalar_select %p1929, %s1928, 31
          %s1931 = smul.addr %s1930, 8
          %s1932 = scalar_lea.vmem %s11, %s1931
        $region80: #{diffusion_mlp_v2.1} parent=75 // pred_fallthru
          _
      $region76: #{diffusion_mlp_v2.1} parent=5 // pred_fallthru
        _
    $region6: #{diffusion_mlp_v2.1} parent=1 // loop_footer
      %s22 = sadd.s32 1, %s18
    $region7: #{diffusion_mlp_v2.1} parent=1 // loop_footer_branch
      %17 = sbr.rel target = $region3
    $region8: #{diffusion_mlp_v2.1} parent=1 // loop_exit
      _
    %1933 = vsyncpa [#allocation3], 1
    %s1934 = scalar_lea.sflag [#allocation3], 1
    %1935 = vsyncpa %s1934, 1

</llo_original>
